<compile_context>
chip_gen: v6e
topology: v6e:2x2x1
jax: 0.10.0
libtpu: 0.0.40
codegen_flags: <defaults>
</compile_context>

<pallas_src>
import functools

import jax
import jax.numpy as jnp
from jax.experimental import pallas as pl
from jax.experimental.pallas import tpu as pltpu

F32 = jnp.float32
BF16 = jnp.bfloat16
NEG = -jnp.finfo(jnp.float32).max  # matches torch masked_fill(-finfo.max)


# ----------------------------------------------------------------------------
# Kernel helpers
# ----------------------------------------------------------------------------
def _layernorm(x, g, b, eps=1e-5):
    mu = jnp.mean(x, axis=-1, keepdims=True)
    var = jnp.mean((x - mu) ** 2, axis=-1, keepdims=True)
    return (x - mu) * jax.lax.rsqrt(var + eps) * g + b


def _gelu_exact(x):
    # nn.GELU() default = exact erf formulation
    return 0.5 * x * (1.0 + jax.lax.erf(x * 0.7071067811865476))


# ----------------------------------------------------------------------------
# Transformer block kernel (one batch element per grid step)
# ----------------------------------------------------------------------------
def transformer_block_kernel(x_ref, pos_ref, g1_ref, b1_ref, gc_ref, bc_ref,
                             wq_ref, wk_ref, wv_ref, wout_ref,
                             w1_ref, bb1_ref, w2_ref, bb2_ref,
                             o_ref, *, num_heads, head_dim, scale, causal):
    N, Fd = pos_ref.shape
    H, D = num_heads, head_dim

    # positional embedding + residual (residual stream kept in f32)
    x = x_ref[0] + pos_ref[...]                                    # (N, F) f32

    # pre-attention LayerNorms (norm and norm_context; context == x here)
    xn = _layernorm(x, g1_ref[...], b1_ref[...]).astype(BF16)
    cn = _layernorm(x, gc_ref[...], bc_ref[...]).astype(BF16)

    # projections: bf16 x bf16 -> f32 accumulate (MXU)
    q = jnp.dot(xn, wq_ref[...], preferred_element_type=F32) * scale  # (N, HD)
    k = jnp.dot(cn, wk_ref[...], preferred_element_type=F32)
    v = jnp.dot(cn, wv_ref[...], preferred_element_type=F32)
    q, k, v = q.astype(BF16), k.astype(BF16), v.astype(BF16)

    # fold heads into a leading batch dim -> batched dot_generals over heads
    split = lambda t: jnp.stack([t[:, h * D:(h + 1) * D] for h in range(H)],
                                axis=0)                             # (H, N, D)
    qh, kh, vh = split(q), split(k), split(v)

    sim = jnp.einsum('hnd,hmd->hnm', qh, kh,
                     preferred_element_type=F32)                    # (H, N, N)
    if causal:
        row = jax.lax.broadcasted_iota(jnp.int32, (N, N), 0)
        col = jax.lax.broadcasted_iota(jnp.int32, (N, N), 1)
        sim = jnp.where((col <= row)[None, :, :], sim, NEG)
    m = jnp.max(sim, axis=-1, keepdims=True)
    e = jnp.exp(sim - m)
    attn = (e * pl.reciprocal(jnp.sum(e, axis=-1, keepdims=True),
                              approx=True)).astype(BF16)

    oh = jnp.einsum('hnm,hmd->hnd', attn, vh,
                    preferred_element_type=F32)                     # (H, N, D)
    # lane-concat head outputs -> (N, HD); ONE (N,HD)x(HD,F) output projection
    o2 = jnp.concatenate([oh[h] for h in range(H)], axis=-1).astype(BF16)
    x = x + jnp.dot(o2, wout_ref[...], preferred_element_type=F32)  # attn resid

    # feed-forward: Linear -> GELU -> Linear, + residual
    hmid = _gelu_exact(jnp.dot(x.astype(BF16), w1_ref[...],
                               preferred_element_type=F32) + bb1_ref[...])
    y = x + jnp.dot(hmid.astype(BF16), w2_ref[...],
                    preferred_element_type=F32) + bb2_ref[...]
    o_ref[0] = y
    # TODO(synk): for long sequences, replace the dense (H, N, N) score tensor
    # with flash-style online softmax over kv tiles on an 'arbitrary' grid axis.


# ----------------------------------------------------------------------------
# Streaming (vocab-tiled) logits + cross-entropy kernel
# ----------------------------------------------------------------------------
def logits_ce_kernel(x_ref, w_ref, b_ref, tgt_ref, o_ref,
                     m_ref, s_ref, p_ref, *, tile_t):
    j = pl.program_id(0)

    @pl.when(j == 0)
    def _():
        m_ref[...] = jnp.full(m_ref.shape, -jnp.inf, F32)
        s_ref[...] = jnp.zeros(s_ref.shape, F32)
        p_ref[...] = jnp.zeros(p_ref.shape, F32)

    logits = jnp.dot(x_ref[...].astype(BF16), w_ref[...],
                     preferred_element_type=F32) + b_ref[...]      # (BN, tile_t)
    BN = logits.shape[0]

    # picked logit: the target class lives in exactly one vocab tile
    cls = jax.lax.broadcasted_iota(jnp.int32, logits.shape, 1) + j * tile_t
    p_ref[...] += jnp.sum(jnp.where(cls == tgt_ref[...], logits, 0.0),
                          axis=-1, keepdims=True)

    # streaming log-sum-exp (running max / running sum of exp)
    m_old = m_ref[...]
    m_new = jnp.maximum(m_old, jnp.max(logits, axis=-1, keepdims=True))
    s_ref[...] = (s_ref[...] * jnp.exp(m_old - m_new)
                  + jnp.sum(jnp.exp(logits - m_new), axis=-1, keepdims=True))
    m_ref[...] = m_new

    @pl.when(j == pl.num_programs(0) - 1)
    def _():
        loss_rows = m_ref[...] + jnp.log(s_ref[...]) - p_ref[...]  # (BN, 1)
        o_ref[...] = jnp.sum(loss_rows, axis=0, keepdims=True) * (1.0 / BN)


# ----------------------------------------------------------------------------
# Wrappers
# ----------------------------------------------------------------------------
def _const_spec(shape):
    return pl.BlockSpec(shape, lambda b: (0,) * len(shape))


def transformer_block(x, blk, *, num_heads, head_dim, causal):
    B, N, Fd = x.shape
    HD = num_heads * head_dim
    mid = blk['w1'].shape[1]
    pos = blk['pos'][:N]                                   # JAX glue slice

    kern = functools.partial(transformer_block_kernel, num_heads=num_heads,
                             head_dim=head_dim, scale=head_dim ** -0.5,
                             causal=causal)
    in_specs = [
        pl.BlockSpec((1, N, Fd), lambda b: (b, 0, 0)),     # x (per-batch tile)
        _const_spec((N, Fd)),                              # pos (grid-invariant)
        _const_spec((1, Fd)), _const_spec((1, Fd)),        # g1, b1
        _const_spec((1, Fd)), _const_spec((1, Fd)),        # gc, bc
        _const_spec((Fd, HD)), _const_spec((Fd, HD)), _const_spec((Fd, HD)),
        _const_spec((HD, Fd)),
        _const_spec((Fd, mid)), _const_spec((1, mid)),
        _const_spec((mid, Fd)), _const_spec((1, Fd)),
    ]
    return pl.pallas_call(
        kern,
        out_shape=jax.ShapeDtypeStruct((B, N, Fd), F32),
        grid=(B,),
        in_specs=in_specs,
        out_specs=pl.BlockSpec((1, N, Fd), lambda b: (b, 0, 0)),
        input_output_aliases={0: 0},                       # residual stream in-place
        compiler_params=pltpu.CompilerParams(
            dimension_semantics=("parallel",)),
    )(x, pos, blk['g1'], blk['b1'], blk['gc'], blk['bc'],
      blk['wq'], blk['wk'], blk['wv'], blk['wout'],
      blk['w1'], blk['bb1'], blk['w2'], blk['bb2'])


def logits_cross_entropy(x, w_logits, b_logits, targets, *, vocab_tile=2048):
    B, N, Fd = x.shape
    BN = B * N
    T = w_logits.shape[1]
    x2d = x.reshape(BN, Fd)
    tgt = targets.reshape(BN, 1).astype(jnp.int32)
    tile_t = min(T, vocab_tile)
    assert T % tile_t == 0, "vocab size must be divisible by the vocab tile"
    kern = functools.partial(logits_ce_kernel, tile_t=tile_t)
    loss = pl.pallas_call(
        kern,
        out_shape=jax.ShapeDtypeStruct((1, 1), F32),
        grid=(T // tile_t,),
        in_specs=[
            pl.BlockSpec((BN, Fd), lambda j: (0, 0)),      # activations (resident)
            pl.BlockSpec((Fd, tile_t), lambda j: (0, j)),  # streamed W vocab tile
            pl.BlockSpec((1, tile_t), lambda j: (0, j)),   # streamed bias tile
            pl.BlockSpec((BN, 1), lambda j: (0, 0)),       # targets
        ],
        out_specs=pl.BlockSpec((1, 1), lambda j: (0, 0)),
        scratch_shapes=[pltpu.VMEM((BN, 1), F32)] * 3,     # m, s, picked
        compiler_params=pltpu.CompilerParams(
            dimension_semantics=("arbitrary",)),
    )(x2d, w_logits, b_logits, tgt)
    return loss[0, 0]


def autoregressive_loss(tokens, params, *, num_heads, head_dim, causal=True):
    input_tokens = tokens[:, :-1]
    target_tokens = tokens[:, 1:]
    x = params['emb'][input_tokens].astype(F32)            # embedding gather (glue)
    for blk in params['blocks']:
        x = transformer_block(x, blk, num_heads=num_heads,
                              head_dim=head_dim, causal=causal)
    return logits_cross_entropy(x, params['w_logits'], params['b_logits'],
                                target_tokens)


# ----------------------------------------------------------------------------
# Deterministic parameter init (synthetic; shapes follow the module __init__).
# MXU-facing weight matrices are stored in bf16 (f32 accumulate in-kernel).
# ----------------------------------------------------------------------------
def init_params(key, *, features, head_features, num_heads, multiplier,
                num_layers, max_length, num_tokens):
    std = 0.02
    HD = head_features * num_heads
    mid = features * multiplier
    keys = jax.random.split(key, 2 + num_layers)
    emb = jax.random.normal(keys[0], (num_tokens, features), F32) * std
    w_logits = (jax.random.normal(keys[1], (features, num_tokens), F32)
                * std).astype(BF16)
    b_logits = jnp.zeros((1, num_tokens), F32)
    blocks = []
    for l in range(num_layers):
        k = jax.random.split(keys[2 + l], 7)
        blocks.append(dict(
            pos=jax.random.normal(k[0], (max_length, features), F32) * std,
            g1=jnp.ones((1, features), F32), b1=jnp.zeros((1, features), F32),
            gc=jnp.ones((1, features), F32), bc=jnp.zeros((1, features), F32),
            wq=(jax.random.normal(k[1], (features, HD), F32) * std).astype(BF16),
            wk=(jax.random.normal(k[2], (features, HD), F32) * std).astype(BF16),
            wv=(jax.random.normal(k[3], (features, HD), F32) * std).astype(BF16),
            wout=(jax.random.normal(k[4], (HD, features), F32) * std).astype(BF16),
            w1=(jax.random.normal(k[5], (features, mid), F32) * std).astype(BF16),
            bb1=jnp.zeros((1, mid), F32),
            w2=(jax.random.normal(k[6], (mid, features), F32) * std).astype(BF16),
            bb2=jnp.zeros((1, features), F32),
        ))
    return dict(emb=emb, w_logits=w_logits, b_logits=b_logits, blocks=blocks)


# ----------------------------------------------------------------------------
# Pure-JAX f32 reference (mirrors the PyTorch forward) for a correctness check
# ----------------------------------------------------------------------------
def reference_loss(tokens, params, *, num_heads, head_dim, causal=True):
    inp, tgt = tokens[:, :-1], tokens[:, 1:]
    x = params['emb'][inp].astype(F32)
    B, N, Fd = x.shape
    HD = num_heads * head_dim

    def ln(z, g, b):
        mu = z.mean(-1, keepdims=True)
        var = ((z - mu) ** 2).mean(-1, keepdims=True)
        return (z - mu) / jnp.sqrt(var + 1e-5) * g[0] + b[0]

    for blk in params['blocks']:
        x = x + blk['pos'][:N][None]
        xn, cn = ln(x, blk['g1'], blk['b1']), ln(x, blk['gc'], blk['bc'])
        q = xn @ blk['wq'].astype(F32)
        k = cn @ blk['wk'].astype(F32)
        v = cn @ blk['wv'].astype(F32)
        sh = lambda t: t.reshape(B, N, num_heads, head_dim).transpose(0, 2, 1, 3)
        qh, kh, vh = sh(q), sh(k), sh(v)
        sim = jnp.einsum('bhnd,bhmd->bhnm', qh, kh) * head_dim ** -0.5
        if causal:
            keep = jnp.tril(jnp.ones((N, N), bool))
            sim = jnp.where(keep[None, None], sim, NEG)
        attn = jax.nn.softmax(sim, axis=-1)
        o = jnp.einsum('bhnm,bhmd->bhnd', attn, vh).transpose(0, 2, 1, 3)
        x = x + o.reshape(B, N, HD) @ blk['wout'].astype(F32)
        h = jax.nn.gelu(x @ blk['w1'].astype(F32) + blk['bb1'][0],
                        approximate=False)
        x = x + h @ blk['w2'].astype(F32) + blk['bb2'][0]
    logits = x @ params['w_logits'].astype(F32) + params['b_logits'][0]
    lse = jax.nn.logsumexp(logits, axis=-1)
    picked = jnp.take_along_axis(logits, tgt[..., None], axis=-1)[..., 0]
    return jnp.mean(lse - picked)


# ----------------------------------------------------------------------------
if __name__ == "__main__":
    B, seq = 2, 9                       # input tokens (B, 9) -> model sees n = 8
    features, head_features, num_heads = 32, 16, 2
    multiplier, num_layers = 2, 2
    max_length, num_tokens = 16, 16

    key = jax.random.PRNGKey(0)
    pkey, tkey = jax.random.split(key)
    params = init_params(pkey, features=features, head_features=head_features,
                         num_heads=num_heads, multiplier=multiplier,
                         num_layers=num_layers, max_length=max_length,
                         num_tokens=num_tokens)
    tokens = jax.random.randint(tkey, (B, seq), 0, num_tokens, dtype=jnp.int32)

    loss_fn = jax.jit(functools.partial(autoregressive_loss,
                                        num_heads=num_heads,
                                        head_dim=head_features, causal=True))
    loss = jax.block_until_ready(loss_fn(tokens, params))

    ref = reference_loss(tokens, params, num_heads=num_heads,
                         head_dim=head_features, causal=True)
    assert jnp.allclose(loss, ref, atol=2e-2, rtol=2e-2), (float(loss), float(ref))

    print("KERNEL_OK")
</pallas_src>

<mosaic_0001>
module attributes {stable_mosaic.version = 11 : i64} {
  func.func @transformer_block_kernel(%arg0: i32, %arg1: memref<1x8x32xf32, #tpu.memory_space<vmem>>, %arg2: memref<8x32xf32, #tpu.memory_space<vmem>>, %arg3: memref<1x32xf32, #tpu.memory_space<vmem>>, %arg4: memref<1x32xf32, #tpu.memory_space<vmem>>, %arg5: memref<1x32xf32, #tpu.memory_space<vmem>>, %arg6: memref<1x32xf32, #tpu.memory_space<vmem>>, %arg7: memref<32x32xbf16, #tpu.memory_space<vmem>>, %arg8: memref<32x32xbf16, #tpu.memory_space<vmem>>, %arg9: memref<32x32xbf16, #tpu.memory_space<vmem>>, %arg10: memref<32x32xbf16, #tpu.memory_space<vmem>>, %arg11: memref<32x64xbf16, #tpu.memory_space<vmem>>, %arg12: memref<1x64xf32, #tpu.memory_space<vmem>>, %arg13: memref<64x32xbf16, #tpu.memory_space<vmem>>, %arg14: memref<1x32xf32, #tpu.memory_space<vmem>>, %arg15: memref<1x8x32xf32, #tpu.memory_space<vmem>>) attributes {dimension_semantics = [#tpu.dimension_semantics<parallel>], iteration_bounds = array<i64: 2>, scalar_prefetch = 0 : i64, scratch_operands = 0 : i64, tpu.core_type = #tpu.core_type<tc>, window_params = [{transform_indices = @transform_0, window_bounds = array<i64: 1, 8, 32>}, {pipeline_mode = #tpu.pipeline_mode<synchronous>, transform_indices = @transform_1, window_bounds = array<i64: 8, 32>}, {pipeline_mode = #tpu.pipeline_mode<synchronous>, transform_indices = @transform_2, window_bounds = array<i64: 1, 32>}, {pipeline_mode = #tpu.pipeline_mode<synchronous>, transform_indices = @transform_3, window_bounds = array<i64: 1, 32>}, {pipeline_mode = #tpu.pipeline_mode<synchronous>, transform_indices = @transform_4, window_bounds = array<i64: 1, 32>}, {pipeline_mode = #tpu.pipeline_mode<synchronous>, transform_indices = @transform_5, window_bounds = array<i64: 1, 32>}, {pipeline_mode = #tpu.pipeline_mode<synchronous>, transform_indices = @transform_6, window_bounds = array<i64: 32, 32>}, {pipeline_mode = #tpu.pipeline_mode<synchronous>, transform_indices = @transform_7, window_bounds = array<i64: 32, 32>}, {pipeline_mode = #tpu.pipeline_mode<synchronous>, transform_indices = @transform_8, window_bounds = array<i64: 32, 32>}, {pipeline_mode = #tpu.pipeline_mode<synchronous>, transform_indices = @transform_9, window_bounds = array<i64: 32, 32>}, {pipeline_mode = #tpu.pipeline_mode<synchronous>, transform_indices = @transform_10, window_bounds = array<i64: 32, 64>}, {pipeline_mode = #tpu.pipeline_mode<synchronous>, transform_indices = @transform_11, window_bounds = array<i64: 1, 64>}, {pipeline_mode = #tpu.pipeline_mode<synchronous>, transform_indices = @transform_12, window_bounds = array<i64: 64, 32>}, {pipeline_mode = #tpu.pipeline_mode<synchronous>, transform_indices = @transform_13, window_bounds = array<i64: 1, 32>}, {transform_indices = @transform_14, window_bounds = array<i64: 1, 8, 32>}]} {
    %c0 = arith.constant 0 : index
    %c0_0 = arith.constant 0 : index
    %c0_1 = arith.constant 0 : index
    %0 = vector.load %arg1[%c0, %c0_0, %c0_1] : memref<1x8x32xf32, #tpu.memory_space<vmem>>, vector<1x8x32xf32>
    %1 = vector.shape_cast %0 : vector<1x8x32xf32> to vector<8x32xf32>
    %c0_2 = arith.constant 0 : index
    %c0_3 = arith.constant 0 : index
    %2 = vector.load %arg2[%c0_2, %c0_3] : memref<8x32xf32, #tpu.memory_space<vmem>>, vector<8x32xf32>
    %3 = arith.addf %1, %2 : vector<8x32xf32>
    %c0_4 = arith.constant 0 : index
    %c0_5 = arith.constant 0 : index
    %4 = vector.load %arg3[%c0_4, %c0_5] : memref<1x32xf32, #tpu.memory_space<vmem>>, vector<1x32xf32>
    %c0_6 = arith.constant 0 : index
    %c0_7 = arith.constant 0 : index
    %5 = vector.load %arg4[%c0_6, %c0_7] : memref<1x32xf32, #tpu.memory_space<vmem>>, vector<1x32xf32>
    %cst = arith.constant dense<0.000000e+00> : vector<8xf32>
    %6 = vector.multi_reduction <add>, %3, %cst [1] : vector<8x32xf32> to vector<8xf32>
    %7 = vector.shape_cast %6 : vector<8xf32> to vector<8x1xf32>
    %cst_8 = arith.constant 3.200000e+01 : f32
    %8 = vector.broadcast %cst_8 : f32 to vector<8x1xf32>
    %9 = arith.divf %7, %8 : vector<8x1xf32>
    %10 = vector.broadcast %9 : vector<8x1xf32> to vector<8x32xf32>
    %11 = arith.subf %3, %10 : vector<8x32xf32>
    %12 = arith.mulf %11, %11 : vector<8x32xf32>
    %cst_9 = arith.constant dense<0.000000e+00> : vector<8xf32>
    %13 = vector.multi_reduction <add>, %12, %cst_9 [1] : vector<8x32xf32> to vector<8xf32>
    %14 = vector.shape_cast %13 : vector<8xf32> to vector<8x1xf32>
    %cst_10 = arith.constant 3.200000e+01 : f32
    %15 = vector.broadcast %cst_10 : f32 to vector<8x1xf32>
    %16 = arith.divf %14, %15 : vector<8x1xf32>
    %17 = vector.broadcast %9 : vector<8x1xf32> to vector<8x32xf32>
    %18 = arith.subf %3, %17 : vector<8x32xf32>
    %cst_11 = arith.constant 9.99999974E-6 : f32
    %19 = vector.broadcast %cst_11 : f32 to vector<8x1xf32>
    %20 = arith.addf %16, %19 : vector<8x1xf32>
    %21 = math.rsqrt %20 : vector<8x1xf32>
    %22 = vector.broadcast %21 : vector<8x1xf32> to vector<8x32xf32>
    %23 = arith.mulf %18, %22 : vector<8x32xf32>
    %24 = vector.broadcast %4 : vector<1x32xf32> to vector<8x32xf32>
    %25 = arith.mulf %23, %24 : vector<8x32xf32>
    %26 = vector.broadcast %5 : vector<1x32xf32> to vector<8x32xf32>
    %27 = arith.addf %25, %26 : vector<8x32xf32>
    %28 = arith.truncf %27 : vector<8x32xf32> to vector<8x32xbf16>
    %c0_12 = arith.constant 0 : index
    %c0_13 = arith.constant 0 : index
    %29 = vector.load %arg5[%c0_12, %c0_13] : memref<1x32xf32, #tpu.memory_space<vmem>>, vector<1x32xf32>
    %c0_14 = arith.constant 0 : index
    %c0_15 = arith.constant 0 : index
    %30 = vector.load %arg6[%c0_14, %c0_15] : memref<1x32xf32, #tpu.memory_space<vmem>>, vector<1x32xf32>
    %cst_16 = arith.constant dense<0.000000e+00> : vector<8xf32>
    %31 = vector.multi_reduction <add>, %3, %cst_16 [1] : vector<8x32xf32> to vector<8xf32>
    %32 = vector.shape_cast %31 : vector<8xf32> to vector<8x1xf32>
    %cst_17 = arith.constant 3.200000e+01 : f32
    %33 = vector.broadcast %cst_17 : f32 to vector<8x1xf32>
    %34 = arith.divf %32, %33 : vector<8x1xf32>
    %35 = vector.broadcast %34 : vector<8x1xf32> to vector<8x32xf32>
    %36 = arith.subf %3, %35 : vector<8x32xf32>
    %37 = arith.mulf %36, %36 : vector<8x32xf32>
    %cst_18 = arith.constant dense<0.000000e+00> : vector<8xf32>
    %38 = vector.multi_reduction <add>, %37, %cst_18 [1] : vector<8x32xf32> to vector<8xf32>
    %39 = vector.shape_cast %38 : vector<8xf32> to vector<8x1xf32>
    %cst_19 = arith.constant 3.200000e+01 : f32
    %40 = vector.broadcast %cst_19 : f32 to vector<8x1xf32>
    %41 = arith.divf %39, %40 : vector<8x1xf32>
    %42 = vector.broadcast %34 : vector<8x1xf32> to vector<8x32xf32>
    %43 = arith.subf %3, %42 : vector<8x32xf32>
    %cst_20 = arith.constant 9.99999974E-6 : f32
    %44 = vector.broadcast %cst_20 : f32 to vector<8x1xf32>
    %45 = arith.addf %41, %44 : vector<8x1xf32>
    %46 = math.rsqrt %45 : vector<8x1xf32>
    %47 = vector.broadcast %46 : vector<8x1xf32> to vector<8x32xf32>
    %48 = arith.mulf %43, %47 : vector<8x32xf32>
    %49 = vector.broadcast %29 : vector<1x32xf32> to vector<8x32xf32>
    %50 = arith.mulf %48, %49 : vector<8x32xf32>
    %51 = vector.broadcast %30 : vector<1x32xf32> to vector<8x32xf32>
    %52 = arith.addf %50, %51 : vector<8x32xf32>
    %53 = arith.truncf %52 : vector<8x32xf32> to vector<8x32xbf16>
    %c0_21 = arith.constant 0 : index
    %c0_22 = arith.constant 0 : index
    %54 = vector.load %arg7[%c0_21, %c0_22] : memref<32x32xbf16, #tpu.memory_space<vmem>>, vector<32x32xbf16>
    %cst_23 = arith.constant dense<0.000000e+00> : vector<8x32xf32>
    %55 = tpu.matmul %28, %54, %cst_23 {dimension_numbers = #tpu.dot_dimension_numbers<[1], [0], [0], [1], [0, 0, 1, 1], [], []>} : vector<8x32xbf16>, vector<32x32xbf16>, vector<8x32xf32> -> vector<8x32xf32>
    %cst_24 = arith.constant 2.500000e-01 : f32
    %56 = vector.broadcast %cst_24 : f32 to vector<8x32xf32>
    %57 = arith.mulf %55, %56 : vector<8x32xf32>
    %c0_25 = arith.constant 0 : index
    %c0_26 = arith.constant 0 : index
    %58 = vector.load %arg8[%c0_25, %c0_26] : memref<32x32xbf16, #tpu.memory_space<vmem>>, vector<32x32xbf16>
    %cst_27 = arith.constant dense<0.000000e+00> : vector<8x32xf32>
    %59 = tpu.matmul %53, %58, %cst_27 {dimension_numbers = #tpu.dot_dimension_numbers<[1], [0], [0], [1], [0, 0, 1, 1], [], []>} : vector<8x32xbf16>, vector<32x32xbf16>, vector<8x32xf32> -> vector<8x32xf32>
    %c0_28 = arith.constant 0 : index
    %c0_29 = arith.constant 0 : index
    %60 = vector.load %arg9[%c0_28, %c0_29] : memref<32x32xbf16, #tpu.memory_space<vmem>>, vector<32x32xbf16>
    %cst_30 = arith.constant dense<0.000000e+00> : vector<8x32xf32>
    %61 = tpu.matmul %53, %60, %cst_30 {dimension_numbers = #tpu.dot_dimension_numbers<[1], [0], [0], [1], [0, 0, 1, 1], [], []>} : vector<8x32xbf16>, vector<32x32xbf16>, vector<8x32xf32> -> vector<8x32xf32>
    %62 = arith.truncf %57 : vector<8x32xf32> to vector<8x32xbf16>
    %63 = arith.truncf %59 : vector<8x32xf32> to vector<8x32xbf16>
    %64 = arith.truncf %61 : vector<8x32xf32> to vector<8x32xbf16>
    %65 = vector.extract_strided_slice %62 {offsets = [0, 0], sizes = [8, 16], strides = [1, 1]} : vector<8x32xbf16> to vector<8x16xbf16>
    %66 = vector.extract_strided_slice %62 {offsets = [0, 16], sizes = [8, 16], strides = [1, 1]} : vector<8x32xbf16> to vector<8x16xbf16>
    %67 = vector.shape_cast %65 : vector<8x16xbf16> to vector<1x8x16xbf16>
    %68 = vector.shape_cast %66 : vector<8x16xbf16> to vector<1x8x16xbf16>
    %69 = tpu.concatenate %67, %68 in 0 : vector<1x8x16xbf16>, vector<1x8x16xbf16> -> vector<2x8x16xbf16>
    %70 = vector.extract_strided_slice %63 {offsets = [0, 0], sizes = [8, 16], strides = [1, 1]} : vector<8x32xbf16> to vector<8x16xbf16>
    %71 = vector.extract_strided_slice %63 {offsets = [0, 16], sizes = [8, 16], strides = [1, 1]} : vector<8x32xbf16> to vector<8x16xbf16>
    %72 = vector.shape_cast %70 : vector<8x16xbf16> to vector<1x8x16xbf16>
    %73 = vector.shape_cast %71 : vector<8x16xbf16> to vector<1x8x16xbf16>
    %74 = tpu.concatenate %72, %73 in 0 : vector<1x8x16xbf16>, vector<1x8x16xbf16> -> vector<2x8x16xbf16>
    %75 = vector.extract_strided_slice %64 {offsets = [0, 0], sizes = [8, 16], strides = [1, 1]} : vector<8x32xbf16> to vector<8x16xbf16>
    %76 = vector.extract_strided_slice %64 {offsets = [0, 16], sizes = [8, 16], strides = [1, 1]} : vector<8x32xbf16> to vector<8x16xbf16>
    %77 = vector.shape_cast %75 : vector<8x16xbf16> to vector<1x8x16xbf16>
    %78 = vector.shape_cast %76 : vector<8x16xbf16> to vector<1x8x16xbf16>
    %79 = tpu.concatenate %77, %78 in 0 : vector<1x8x16xbf16>, vector<1x8x16xbf16> -> vector<2x8x16xbf16>
    "tpu.trace_start"() <{level = 10 : i32, message = "hnd,hmd->hnm"}> : () -> ()
    %cst_31 = arith.constant dense<0.000000e+00> : vector<2x8x8xf32>
    %80 = tpu.matmul %69, %74, %cst_31 {dimension_numbers = #tpu.dot_dimension_numbers<[2], [2], [1], [1], [0, 0, 0, 1, 1, 1], [0], [0]>} : vector<2x8x16xbf16>, vector<2x8x16xbf16>, vector<2x8x8xf32> -> vector<2x8x8xf32>
    "tpu.trace_stop"() : () -> ()
    %81 = tpu.iota {dimensions = array<i32: 0>} : vector<8x8xi32>
    %82 = tpu.iota {dimensions = array<i32: 1>} : vector<8x8xi32>
    %83 = arith.cmpi sle, %82, %81 : vector<8x8xi32>
    %84 = vector.shape_cast %83 : vector<8x8xi1> to vector<1x8x8xi1>
    %cst_32 = arith.constant -3.40282347E+38 : f32
    %85 = vector.shape_cast %84 : vector<1x8x8xi1> to vector<1x8x8xi1>
    %86 = vector.broadcast %85 : vector<1x8x8xi1> to vector<2x8x8xi1>
    %87 = vector.broadcast %cst_32 : f32 to vector<2x8x8xf32>
    %88 = arith.select %86, %80, %87 : vector<2x8x8xi1>, vector<2x8x8xf32>
    %cst_33 = arith.constant dense<0xFF800000> : vector<2x8xf32>
    %89 = vector.multi_reduction <maximumf>, %88, %cst_33 [2] : vector<2x8x8xf32> to vector<2x8xf32>
    %90 = vector.shape_cast %89 : vector<2x8xf32> to vector<2x8x1xf32>
    %91 = vector.broadcast %90 : vector<2x8x1xf32> to vector<2x8x8xf32>
    %92 = arith.subf %88, %91 : vector<2x8x8xf32>
    %93 = math.exp %92 : vector<2x8x8xf32>
    %cst_34 = arith.constant dense<0.000000e+00> : vector<2x8xf32>
    %94 = vector.multi_reduction <add>, %93, %cst_34 [2] : vector<2x8x8xf32> to vector<2x8xf32>
    %95 = vector.shape_cast %94 : vector<2x8xf32> to vector<2x8x1xf32>
    %96 = tpu.reciprocal %95 {approx = true} : vector<2x8x1xf32> -> vector<2x8x1xf32>
    %97 = vector.broadcast %96 : vector<2x8x1xf32> to vector<2x8x8xf32>
    %98 = arith.mulf %93, %97 : vector<2x8x8xf32>
    %99 = arith.truncf %98 : vector<2x8x8xf32> to vector<2x8x8xbf16>
    "tpu.trace_start"() <{level = 10 : i32, message = "hnm,hmd->hnd"}> : () -> ()
    %cst_35 = arith.constant dense<0.000000e+00> : vector<2x8x16xf32>
    %100 = tpu.matmul %99, %79, %cst_35 {dimension_numbers = #tpu.dot_dimension_numbers<[2], [1], [1], [2], [0, 0, 0, 1, 1, 2], [0], [0]>} : vector<2x8x8xbf16>, vector<2x8x16xbf16>, vector<2x8x16xf32> -> vector<2x8x16xf32>
    "tpu.trace_stop"() : () -> ()
    %101 = vector.extract_strided_slice %100 {offsets = [0, 0, 0], sizes = [1, 8, 16], strides = [1, 1, 1]} : vector<2x8x16xf32> to vector<1x8x16xf32>
    %102 = vector.shape_cast %101 : vector<1x8x16xf32> to vector<8x16xf32>
    %103 = vector.extract_strided_slice %100 {offsets = [1, 0, 0], sizes = [1, 8, 16], strides = [1, 1, 1]} : vector<2x8x16xf32> to vector<1x8x16xf32>
    %104 = vector.shape_cast %103 : vector<1x8x16xf32> to vector<8x16xf32>
    %105 = tpu.concatenate %102, %104 in 1 : vector<8x16xf32>, vector<8x16xf32> -> vector<8x32xf32>
    %106 = arith.truncf %105 : vector<8x32xf32> to vector<8x32xbf16>
    %c0_36 = arith.constant 0 : index
    %c0_37 = arith.constant 0 : index
    %107 = vector.load %arg10[%c0_36, %c0_37] : memref<32x32xbf16, #tpu.memory_space<vmem>>, vector<32x32xbf16>
    %cst_38 = arith.constant dense<0.000000e+00> : vector<8x32xf32>
    %108 = tpu.matmul %106, %107, %cst_38 {dimension_numbers = #tpu.dot_dimension_numbers<[1], [0], [0], [1], [0, 0, 1, 1], [], []>} : vector<8x32xbf16>, vector<32x32xbf16>, vector<8x32xf32> -> vector<8x32xf32>
    %109 = arith.addf %3, %108 : vector<8x32xf32>
    %110 = arith.truncf %109 : vector<8x32xf32> to vector<8x32xbf16>
    %c0_39 = arith.constant 0 : index
    %c0_40 = arith.constant 0 : index
    %111 = vector.load %arg11[%c0_39, %c0_40] : memref<32x64xbf16, #tpu.memory_space<vmem>>, vector<32x64xbf16>
    %cst_41 = arith.constant dense<0.000000e+00> : vector<8x64xf32>
    %112 = tpu.matmul %110, %111, %cst_41 {dimension_numbers = #tpu.dot_dimension_numbers<[1], [0], [0], [1], [0, 0, 1, 1], [], []>} : vector<8x32xbf16>, vector<32x64xbf16>, vector<8x64xf32> -> vector<8x64xf32>
    %c0_42 = arith.constant 0 : index
    %c0_43 = arith.constant 0 : index
    %113 = vector.load %arg12[%c0_42, %c0_43] : memref<1x64xf32, #tpu.memory_space<vmem>>, vector<1x64xf32>
    %114 = vector.broadcast %113 : vector<1x64xf32> to vector<8x64xf32>
    %115 = arith.addf %112, %114 : vector<8x64xf32>
    %cst_44 = arith.constant 5.000000e-01 : f32
    %116 = vector.broadcast %cst_44 : f32 to vector<8x64xf32>
    %117 = arith.mulf %116, %115 : vector<8x64xf32>
    %cst_45 = arith.constant 0.707106769 : f32
    %118 = vector.broadcast %cst_45 : f32 to vector<8x64xf32>
    %119 = arith.mulf %115, %118 : vector<8x64xf32>
    %120 = math.erf %119 : vector<8x64xf32>
    %cst_46 = arith.constant 1.000000e+00 : f32
    %121 = vector.broadcast %cst_46 : f32 to vector<8x64xf32>
    %122 = arith.addf %121, %120 : vector<8x64xf32>
    %123 = arith.mulf %117, %122 : vector<8x64xf32>
    %124 = arith.truncf %123 : vector<8x64xf32> to vector<8x64xbf16>
    %c0_47 = arith.constant 0 : index
    %c0_48 = arith.constant 0 : index
    %125 = vector.load %arg13[%c0_47, %c0_48] : memref<64x32xbf16, #tpu.memory_space<vmem>>, vector<64x32xbf16>
    %cst_49 = arith.constant dense<0.000000e+00> : vector<8x32xf32>
    %126 = tpu.matmul %124, %125, %cst_49 {dimension_numbers = #tpu.dot_dimension_numbers<[1], [0], [0], [1], [0, 0, 1, 1], [], []>} : vector<8x64xbf16>, vector<64x32xbf16>, vector<8x32xf32> -> vector<8x32xf32>
    %127 = arith.addf %109, %126 : vector<8x32xf32>
    %c0_50 = arith.constant 0 : index
    %c0_51 = arith.constant 0 : index
    %128 = vector.load %arg14[%c0_50, %c0_51] : memref<1x32xf32, #tpu.memory_space<vmem>>, vector<1x32xf32>
    %129 = vector.broadcast %128 : vector<1x32xf32> to vector<8x32xf32>
    %130 = arith.addf %127, %129 : vector<8x32xf32>
    %c0_52 = arith.constant 0 : index
    %c0_53 = arith.constant 0 : index
    %c0_54 = arith.constant 0 : index
    %131 = vector.load %arg15[%c0_52, %c0_53, %c0_54] : memref<1x8x32xf32, #tpu.memory_space<vmem>>, vector<1x8x32xf32>
    %132 = vector.shape_cast %131 : vector<1x8x32xf32> to vector<8x32xf32>
    %133 = vector.shape_cast %130 : vector<8x32xf32> to vector<1x8x32xf32>
    tpu.vector_store %arg15[%c0_52, %c0_53, %c0_54], %133 {strides = array<i32>} : memref<1x8x32xf32, #tpu.memory_space<vmem>>, vector<1x8x32xf32>,
    return
  }
  func.func @transform_0(%arg0: i32) -> (i32, i32, i32) {
    %c0_i32 = arith.constant 0 : i32
    %c0_i32_0 = arith.constant 0 : i32
    %c0_i32_1 = arith.constant 0 : i32
    return %arg0, %c0_i32, %c0_i32_0 : i32, i32, i32
  }
  func.func @transform_1(%arg0: i32) -> (i32, i32) {
    %c0_i32 = arith.constant 0 : i32
    %c0_i32_0 = arith.constant 0 : i32
    %c0_i32_1 = arith.constant 0 : i32
    return %c0_i32, %c0_i32_0 : i32, i32
  }
  func.func @transform_2(%arg0: i32) -> (i32, i32) {
    %c0_i32 = arith.constant 0 : i32
    %c0_i32_0 = arith.constant 0 : i32
    %c0_i32_1 = arith.constant 0 : i32
    return %c0_i32, %c0_i32_0 : i32, i32
  }
  func.func @transform_3(%arg0: i32) -> (i32, i32) {
    %c0_i32 = arith.constant 0 : i32
    %c0_i32_0 = arith.constant 0 : i32
    %c0_i32_1 = arith.constant 0 : i32
    return %c0_i32, %c0_i32_0 : i32, i32
  }
  func.func @transform_4(%arg0: i32) -> (i32, i32) {
    %c0_i32 = arith.constant 0 : i32
    %c0_i32_0 = arith.constant 0 : i32
    %c0_i32_1 = arith.constant 0 : i32
    return %c0_i32, %c0_i32_0 : i32, i32
  }
  func.func @transform_5(%arg0: i32) -> (i32, i32) {
    %c0_i32 = arith.constant 0 : i32
    %c0_i32_0 = arith.constant 0 : i32
    %c0_i32_1 = arith.constant 0 : i32
    return %c0_i32, %c0_i32_0 : i32, i32
  }
  func.func @transform_6(%arg0: i32) -> (i32, i32) {
    %c0_i32 = arith.constant 0 : i32
    %c0_i32_0 = arith.constant 0 : i32
    %c0_i32_1 = arith.constant 0 : i32
    return %c0_i32, %c0_i32_0 : i32, i32
  }
  func.func @transform_7(%arg0: i32) -> (i32, i32) {
    %c0_i32 = arith.constant 0 : i32
    %c0_i32_0 = arith.constant 0 : i32
    %c0_i32_1 = arith.constant 0 : i32
    return %c0_i32, %c0_i32_0 : i32, i32
  }
  func.func @transform_8(%arg0: i32) -> (i32, i32) {
    %c0_i32 = arith.constant 0 : i32
    %c0_i32_0 = arith.constant 0 : i32
    %c0_i32_1 = arith.constant 0 : i32
    return %c0_i32, %c0_i32_0 : i32, i32
  }
  func.func @transform_9(%arg0: i32) -> (i32, i32) {
    %c0_i32 = arith.constant 0 : i32
    %c0_i32_0 = arith.constant 0 : i32
    %c0_i32_1 = arith.constant 0 : i32
    return %c0_i32, %c0_i32_0 : i32, i32
  }
  func.func @transform_10(%arg0: i32) -> (i32, i32) {
    %c0_i32 = arith.constant 0 : i32
    %c0_i32_0 = arith.constant 0 : i32
    %c0_i32_1 = arith.constant 0 : i32
    return %c0_i32, %c0_i32_0 : i32, i32
  }
  func.func @transform_11(%arg0: i32) -> (i32, i32) {
    %c0_i32 = arith.constant 0 : i32
    %c0_i32_0 = arith.constant 0 : i32
    %c0_i32_1 = arith.constant 0 : i32
    return %c0_i32, %c0_i32_0 : i32, i32
  }
  func.func @transform_12(%arg0: i32) -> (i32, i32) {
    %c0_i32 = arith.constant 0 : i32
    %c0_i32_0 = arith.constant 0 : i32
    %c0_i32_1 = arith.constant 0 : i32
    return %c0_i32, %c0_i32_0 : i32, i32
  }
  func.func @transform_13(%arg0: i32) -> (i32, i32) {
    %c0_i32 = arith.constant 0 : i32
    %c0_i32_0 = arith.constant 0 : i32
    %c0_i32_1 = arith.constant 0 : i32
    return %c0_i32, %c0_i32_0 : i32, i32
  }
  func.func @transform_14(%arg0: i32) -> (i32, i32, i32) {
    %c0_i32 = arith.constant 0 : i32
    %c0_i32_0 = arith.constant 0 : i32
    %c0_i32_1 = arith.constant 0 : i32
    return %arg0, %c0_i32, %c0_i32_0 : i32, i32, i32
  }
}

module attributes {stable_mosaic.version = 11 : i64} {
  func.func @logits_ce_kernel(%arg0: i32, %arg1: memref<16x32xf32, #tpu.memory_space<vmem>>, %arg2: memref<32x16xbf16, #tpu.memory_space<vmem>>, %arg3: memref<1x16xf32, #tpu.memory_space<vmem>>, %arg4: memref<16x1xi32, #tpu.memory_space<vmem>>, %arg5: memref<1x1xf32, #tpu.memory_space<vmem>>, %arg6: memref<16x1xf32, #tpu.memory_space<vmem>>, %arg7: memref<16x1xf32, #tpu.memory_space<vmem>>, %arg8: memref<16x1xf32, #tpu.memory_space<vmem>>) attributes {dimension_semantics = [#tpu.dimension_semantics<arbitrary>], iteration_bounds = array<i64: 1>, scalar_prefetch = 0 : i64, scratch_operands = 3 : i64, tpu.core_type = #tpu.core_type<tc>, window_params = [{pipeline_mode = #tpu.pipeline_mode<synchronous>, transform_indices = @transform_0, window_bounds = array<i64: 16, 32>}, {transform_indices = @transform_1, window_bounds = array<i64: 32, 16>}, {transform_indices = @transform_2, window_bounds = array<i64: 1, 16>}, {pipeline_mode = #tpu.pipeline_mode<synchronous>, transform_indices = @transform_3, window_bounds = array<i64: 16, 1>}, {pipeline_mode = #tpu.pipeline_mode<synchronous>, transform_indices = @transform_4, window_bounds = array<i64: 1, 1>}]} {
    %c0_i32 = arith.constant 0 : i32
    %0 = arith.cmpi eq, %arg0, %c0_i32 : i32
    %1 = arith.extui %0 : i1 to i32
    %c0_i32_0 = arith.constant 0 : i32
    %2 = arith.cmpi ne, %1, %c0_i32_0 : i32
    scf.if %2 {
      %cst_26 = arith.constant 0xFF800000 : f32
      %43 = vector.broadcast %cst_26 : f32 to vector<16x1xf32>
      %c0_27 = arith.constant 0 : index
      %c0_28 = arith.constant 0 : index
      %44 = vector.load %arg6[%c0_27, %c0_28] : memref<16x1xf32, #tpu.memory_space<vmem>>, vector<16x1xf32>
      tpu.vector_store %arg6[%c0_27, %c0_28], %43 {strides = array<i32>} : memref<16x1xf32, #tpu.memory_space<vmem>>, vector<16x1xf32>,
      %cst_29 = arith.constant 0.000000e+00 : f32
      %45 = vector.broadcast %cst_29 : f32 to vector<16x1xf32>
      %c0_30 = arith.constant 0 : index
      %c0_31 = arith.constant 0 : index
      %46 = vector.load %arg7[%c0_30, %c0_31] : memref<16x1xf32, #tpu.memory_space<vmem>>, vector<16x1xf32>
      tpu.vector_store %arg7[%c0_30, %c0_31], %45 {strides = array<i32>} : memref<16x1xf32, #tpu.memory_space<vmem>>, vector<16x1xf32>,
      %cst_32 = arith.constant 0.000000e+00 : f32
      %47 = vector.broadcast %cst_32 : f32 to vector<16x1xf32>
      %c0_33 = arith.constant 0 : index
      %c0_34 = arith.constant 0 : index
      %48 = vector.load %arg8[%c0_33, %c0_34] : memref<16x1xf32, #tpu.memory_space<vmem>>, vector<16x1xf32>
      tpu.vector_store %arg8[%c0_33, %c0_34], %47 {strides = array<i32>} : memref<16x1xf32, #tpu.memory_space<vmem>>, vector<16x1xf32>,
    } else {
    }
    %c0 = arith.constant 0 : index
    %c0_1 = arith.constant 0 : index
    %3 = vector.load %arg1[%c0, %c0_1] : memref<16x32xf32, #tpu.memory_space<vmem>>, vector<16x32xf32>
    %4 = arith.truncf %3 : vector<16x32xf32> to vector<16x32xbf16>
    %c0_2 = arith.constant 0 : index
    %c0_3 = arith.constant 0 : index
    %5 = vector.load %arg2[%c0_2, %c0_3] : memref<32x16xbf16, #tpu.memory_space<vmem>>, vector<32x16xbf16>
    %cst = arith.constant dense<0.000000e+00> : vector<16x16xf32>
    %6 = tpu.matmul %4, %5, %cst {dimension_numbers = #tpu.dot_dimension_numbers<[1], [0], [0], [1], [0, 0, 1, 1], [], []>} : vector<16x32xbf16>, vector<32x16xbf16>, vector<16x16xf32> -> vector<16x16xf32>
    %c0_4 = arith.constant 0 : index
    %c0_5 = arith.constant 0 : index
    %7 = vector.load %arg3[%c0_4, %c0_5] : memref<1x16xf32, #tpu.memory_space<vmem>>, vector<1x16xf32>
    %8 = vector.broadcast %7 : vector<1x16xf32> to vector<16x16xf32>
    %9 = arith.addf %6, %8 : vector<16x16xf32>
    %10 = tpu.iota {dimensions = array<i32: 1>} : vector<16x16xi32>
    %c16_i32 = arith.constant 16 : i32
    %11 = arith.muli %arg0, %c16_i32 : i32
    %12 = vector.broadcast %11 : i32 to vector<16x16xi32>
    %13 = arith.addi %10, %12 : vector<16x16xi32>
    %c0_6 = arith.constant 0 : index
    %c0_7 = arith.constant 0 : index
    %14 = vector.load %arg8[%c0_6, %c0_7] : memref<16x1xf32, #tpu.memory_space<vmem>>, vector<16x1xf32>
    %c0_8 = arith.constant 0 : index
    %c0_9 = arith.constant 0 : index
    %15 = vector.load %arg4[%c0_8, %c0_9] : memref<16x1xi32, #tpu.memory_space<vmem>>, vector<16x1xi32>
    %16 = vector.broadcast %15 : vector<16x1xi32> to vector<16x16xi32>
    %17 = arith.cmpi eq, %13, %16 : vector<16x16xi32>
    %cst_10 = arith.constant 0.000000e+00 : f32
    %18 = vector.broadcast %cst_10 : f32 to vector<16x16xf32>
    %19 = arith.select %17, %9, %18 : vector<16x16xi1>, vector<16x16xf32>
    %cst_11 = arith.constant dense<0.000000e+00> : vector<16xf32>
    %20 = vector.multi_reduction <add>, %19, %cst_11 [1] : vector<16x16xf32> to vector<16xf32>
    %21 = vector.shape_cast %20 : vector<16xf32> to vector<16x1xf32>
    %22 = arith.addf %14, %21 : vector<16x1xf32>
    %c0_12 = arith.constant 0 : index
    %c0_13 = arith.constant 0 : index
    %23 = vector.load %arg8[%c0_12, %c0_13] : memref<16x1xf32, #tpu.memory_space<vmem>>, vector<16x1xf32>
    tpu.vector_store %arg8[%c0_12, %c0_13], %22 {strides = array<i32>} : memref<16x1xf32, #tpu.memory_space<vmem>>, vector<16x1xf32>,
    %c0_14 = arith.constant 0 : index
    %c0_15 = arith.constant 0 : index
    %24 = vector.load %arg6[%c0_14, %c0_15] : memref<16x1xf32, #tpu.memory_space<vmem>>, vector<16x1xf32>
    %cst_16 = arith.constant dense<0xFF800000> : vector<16xf32>
    %25 = vector.multi_reduction <maximumf>, %9, %cst_16 [1] : vector<16x16xf32> to vector<16xf32>
    %26 = vector.shape_cast %25 : vector<16xf32> to vector<16x1xf32>
    %27 = arith.maximumf %24, %26 : vector<16x1xf32>
    %c0_17 = arith.constant 0 : index
    %c0_18 = arith.constant 0 : index
    %28 = vector.load %arg7[%c0_17, %c0_18] : memref<16x1xf32, #tpu.memory_space<vmem>>, vector<16x1xf32>
    %29 = arith.subf %24, %27 : vector<16x1xf32>
    %30 = math.exp %29 : vector<16x1xf32>
    %31 = arith.mulf %28, %30 : vector<16x1xf32>
    %32 = vector.broadcast %27 : vector<16x1xf32> to vector<16x16xf32>
    %33 = arith.subf %9, %32 : vector<16x16xf32>
    %34 = math.exp %33 : vector<16x16xf32>
    %cst_19 = arith.constant dense<0.000000e+00> : vector<16xf32>
    %35 = vector.multi_reduction <add>, %34, %cst_19 [1] : vector<16x16xf32> to vector<16xf32>
    %36 = vector.shape_cast %35 : vector<16xf32> to vector<16x1xf32>
    %37 = arith.addf %31, %36 : vector<16x1xf32>
    %c0_20 = arith.constant 0 : index
    %c0_21 = arith.constant 0 : index
    %38 = vector.load %arg7[%c0_20, %c0_21] : memref<16x1xf32, #tpu.memory_space<vmem>>, vector<16x1xf32>
    tpu.vector_store %arg7[%c0_20, %c0_21], %37 {strides = array<i32>} : memref<16x1xf32, #tpu.memory_space<vmem>>, vector<16x1xf32>,
    %c0_22 = arith.constant 0 : index
    %c0_23 = arith.constant 0 : index
    %39 = vector.load %arg6[%c0_22, %c0_23] : memref<16x1xf32, #tpu.memory_space<vmem>>, vector<16x1xf32>
    tpu.vector_store %arg6[%c0_22, %c0_23], %27 {strides = array<i32>} : memref<16x1xf32, #tpu.memory_space<vmem>>, vector<16x1xf32>,
    %c0_i32_24 = arith.constant 0 : i32
    %40 = arith.cmpi eq, %arg0, %c0_i32_24 : i32
    %41 = arith.extui %40 : i1 to i32
    %c0_i32_25 = arith.constant 0 : i32
    %42 = arith.cmpi ne, %41, %c0_i32_25 : i32
    scf.if %42 {
      %c0_26 = arith.constant 0 : index
      %c0_27 = arith.constant 0 : index
      %43 = vector.load %arg6[%c0_26, %c0_27] : memref<16x1xf32, #tpu.memory_space<vmem>>, vector<16x1xf32>
      %c0_28 = arith.constant 0 : index
      %c0_29 = arith.constant 0 : index
      %44 = vector.load %arg7[%c0_28, %c0_29] : memref<16x1xf32, #tpu.memory_space<vmem>>, vector<16x1xf32>
      %45 = math.log %44 : vector<16x1xf32>
      %46 = arith.addf %43, %45 : vector<16x1xf32>
      %c0_30 = arith.constant 0 : index
      %c0_31 = arith.constant 0 : index
      %47 = vector.load %arg8[%c0_30, %c0_31] : memref<16x1xf32, #tpu.memory_space<vmem>>, vector<16x1xf32>
      %48 = arith.subf %46, %47 : vector<16x1xf32>
      %cst_32 = arith.constant dense<0.000000e+00> : vector<1xf32>
      %49 = vector.multi_reduction <add>, %48, %cst_32 [0] : vector<16x1xf32> to vector<1xf32>
      %50 = vector.shape_cast %49 : vector<1xf32> to vector<1x1xf32>
      %cst_33 = arith.constant 6.250000e-02 : f32
      %51 = vector.broadcast %cst_33 : f32 to vector<1x1xf32>
      %52 = arith.mulf %50, %51 : vector<1x1xf32>
      %c0_34 = arith.constant 0 : index
      %c0_35 = arith.constant 0 : index
      %53 = vector.load %arg5[%c0_34, %c0_35] : memref<1x1xf32, #tpu.memory_space<vmem>>, vector<1x1xf32>
      tpu.vector_store %arg5[%c0_34, %c0_35], %52 {strides = array<i32>} : memref<1x1xf32, #tpu.memory_space<vmem>>, vector<1x1xf32>,
    } else {
    }
    return
  }
  func.func @transform_0(%arg0: i32) -> (i32, i32) {
    %c0_i32 = arith.constant 0 : i32
    %c0_i32_0 = arith.constant 0 : i32
    %c0_i32_1 = arith.constant 0 : i32
    return %c0_i32, %c0_i32_0 : i32, i32
  }
  func.func @transform_1(%arg0: i32) -> (i32, i32) {
    %c0_i32 = arith.constant 0 : i32
    %c0_i32_0 = arith.constant 0 : i32
    return %c0_i32, %arg0 : i32, i32
  }
  func.func @transform_2(%arg0: i32) -> (i32, i32) {
    %c0_i32 = arith.constant 0 : i32
    %c0_i32_0 = arith.constant 0 : i32
    return %c0_i32, %arg0 : i32, i32
  }
  func.func @transform_3(%arg0: i32) -> (i32, i32) {
    %c0_i32 = arith.constant 0 : i32
    %c0_i32_0 = arith.constant 0 : i32
    %c0_i32_1 = arith.constant 0 : i32
    return %c0_i32, %c0_i32_0 : i32, i32
  }
  func.func @transform_4(%arg0: i32) -> (i32, i32) {
    %c0_i32 = arith.constant 0 : i32
    %c0_i32_0 = arith.constant 0 : i32
    %c0_i32_1 = arith.constant 0 : i32
    return %c0_i32, %c0_i32_0 : i32, i32
  }
}

</mosaic_0001>

<llo_original>
// kernel: autoregressive_loss.5
$region0: #{autoregressive_loss.5}
  #allocation0 [shape = 'u32[]', space=smem, size = 0x4, offset = 0x4, fixed_abs, tag = 'smem constant byte address 0x4 - core index']
  #allocation1 [shape = 'u32[144,128]{1,0:T(1,128)}', space=vmem, size = 0x12000, scoped, tag = 'internal scratch']
  #allocation2 [shape = 'f32[16,1]{1,0:T(8,128)}', space=vmem, size = 0x2000, scoped, tag = 'scratch operand']
  #allocation3 [shape = 'f32[16,1]{1,0:T(8,128)}', space=vmem, size = 0x2000, scoped, tag = 'scratch operand']
  #allocation4 [shape = 'f32[16,1]{1,0:T(8,128)}', space=vmem, size = 0x2000, scoped, tag = 'scratch operand']
  %s0 = inlined_call_operand.vmem [shape: f32[16,32], index: 0, kind: input, shape index: {}]
  %s1 = inlined_call_operand.vmem [shape: bf16[32,16], index: 1, kind: input, shape index: {}]
  %s2 = inlined_call_operand.vmem [shape: f32[1,16], index: 2, kind: input, shape index: {}]
  %s3 = inlined_call_operand.vmem [shape: s32[16,1], index: 3, kind: input, shape index: {}]
  %s4 = inlined_call_operand.hbm [shape: f32[1,1], index: 4, kind: output, shape index: {}]
  %s5 = sld [smem:[#allocation0]]
  $region34: #{autoregressive_loss.5} parent=0
    _
  %s7 = ssub.s32 1, %s5
  %s8 = scalar_select 0, %s7, %s5
  $region1: #{autoregressive_loss.5} parent=0
    #allocation5 [shape = 'u8[512]{0}', space=vmem, size = 0x400, scoped, tag = 'output window, operand 0, single buffered']
    #allocation6 [shape = 's32[1]{0}', space=sflag, size = 0x4, scoped, tag = 'scoped memory for autoregressive_loss.5']
    %9 = vsyncpa [#allocation6], 0
    // Predicated region
    $region2: #{autoregressive_loss.5} parent=1 // pred_check
      _
    $region3: #{autoregressive_loss.5} parent=1 // pred_check_branch
      %11 = sbr.rel (0) target = $region5
    $region4: #{autoregressive_loss.5} parent=1 // pred_region
      _
    $region5: #{autoregressive_loss.5} parent=1 // pred_fallthru
      _
    // Predicated region
    $region6: #{autoregressive_loss.5} parent=1 // pred_check
      _
    $region7: #{autoregressive_loss.5} parent=1 // pred_check_branch
      %13 = sbr.rel (0) target = $region9
    $region8: #{autoregressive_loss.5} parent=1 // pred_region
      _
    $region9: #{autoregressive_loss.5} parent=1 // pred_fallthru
      _
    // Predicated region
    $region10: #{autoregressive_loss.5} parent=1 // pred_check
      _
    $region11: #{autoregressive_loss.5} parent=1 // pred_check_branch
      %15 = sbr.rel (0) target = $region13
    $region12: #{autoregressive_loss.5} parent=1 // pred_region
      _
    $region13: #{autoregressive_loss.5} parent=1 // pred_fallthru
      _
    // Predicated region
    $region14: #{autoregressive_loss.5} parent=1 // pred_check
      _
    $region15: #{autoregressive_loss.5} parent=1 // pred_check_branch
      %17 = sbr.rel (0) target = $region17
    $region16: #{autoregressive_loss.5} parent=1 // pred_region
      _
    $region17: #{autoregressive_loss.5} parent=1 // pred_fallthru
      _
    %p19 = scmp.eq.s32.totalorder 0, 0
    // Predicated region
    $region18: #{autoregressive_loss.5} parent=1 // pred_check
      %p20 = pneg %p19
    $region19: #{autoregressive_loss.5} parent=1 // pred_check_branch
      %22 = sbr.rel (%p20) target = $region21
    $region20: #{autoregressive_loss.5} parent=1 // pred_region
      %vm23 = vcmask 7168
      %24 = vst.msk [vmem:[#allocation2] sm:$0xff] %vm23, -inf
      %25 = vst.msk [vmem:[#allocation2 + $0x8] sm:$0xff] %vm23, -inf
      %26 = vst.msk [vmem:[#allocation3] sm:$0xff] %vm23, 0.0
      %27 = vst.msk [vmem:[#allocation3 + $0x8] sm:$0xff] %vm23, 0.0
      %28 = vst.msk [vmem:[#allocation4] sm:$0xff] %vm23, 0.0
      %29 = vst.msk [vmem:[#allocation4 + $0x8] sm:$0xff] %vm23, 0.0
    $region21: #{autoregressive_loss.5} parent=1 // pred_fallthru
      _
    %v30 = vld [vmem:[%s0] sm:$0xff]
    %v31 = vld [vmem:[%s0 + $0x8] sm:$0xff]
    %v32 = vpack.c.bf16 %v31, %v30
    %v33 = vld [vmem:[%s1] sm:$0xf]
    %v34 = vld [vmem:[%s1 + $0x4] sm:$0xf]
    %v35 = vld [vmem:[%s1 + $0x8] sm:$0xf]
    %v36 = vld [vmem:[%s1 + $0xc] sm:$0xf]
    %v37 = vld [vmem:[%s2] sm:$0x1]
    %v39 = vlaneseq
    %v40 = vshrl.u32 %v39, 7
    %v41 = vsub.s32 0, %v40
    %v42 = vrot.slane %v37, %v41
    %v48 = vunpack.c.l.b16 %v33
    %v49 = vunpack.c.l.b16 %v34
    %v50 = vunpack.c.l.b16 %v35
    %v51 = vunpack.c.l.b16 %v36
    %v52 = vpack.c.b16 %v49, %v48
    %v53 = vpack.c.b16 %v51, %v50
    %vm56 = vcmask 261120
    %v58 = vsel %vm56, %v32, 0
    %60 = vmatprep.subr.bf16.mxu0 0
    %61 = vmatpush1.bf16.msra.mxu0 0
    %62 = vmatprep.subr.bf16.mxu0 0
    %63 = vmatpush1.bf16.msra.mxu0 0
    %64 = vmatprep.subr.bf16.mxu0 0
    %65 = vmatpush1.bf16.msra.mxu0 0
    %66 = vmatprep.subr.bf16.mxu0 0
    %67 = vmatpush1.bf16.msra.mxu0 0
    %68 = vmatprep.subr.bf16.mxu0 0
    %69 = vmatpush1.bf16.msra.mxu0 0
    %70 = vmatprep.subr.bf16.mxu0 0
    %71 = vmatpush1.bf16.msra.mxu0 0
    %72 = vmatprep.subr.bf16.mxu0 0
    %73 = vmatpush1.bf16.msra.mxu0 %v53
    %74 = vmatprep.subr.bf16.mxu0 0
    %75 = vmatpush1.bf16.msra.mxu0 %v52
    %76 = vmatprep.subr.bf16.mxu0 0
    %77 = vmatpush2.bf16.msra.mxu0 0
    %78 = vmatprep.subr.bf16.mxu0 0
    %79 = vmatpush2.bf16.msra.mxu0 0
    %80 = vmatprep.subr.bf16.mxu0 0
    %81 = vmatpush2.bf16.msra.mxu0 0
    %82 = vmatprep.subr.bf16.mxu0 0
    %83 = vmatpush2.bf16.msra.mxu0 0
    %84 = vmatprep.subr.bf16.mxu0 0
    %85 = vmatpush2.bf16.msra.mxu0 0
    %86 = vmatprep.subr.bf16.mxu0 0
    %87 = vmatpush2.bf16.msra.mxu0 0
    %88 = vmatprep.subr.bf16.mxu0 0
    %89 = vmatpush2.bf16.msra.mxu0 0
    %90 = vmatprep.subr.bf16.mxu0 0
    %91 = vmatpush2.bf16.msra.mxu0 0
    %92 = vmatprep.mubr.bf16.mxu0 0
    %93 = vmatmul.mubr.bf16.gmra.mxu0 %v58
    %v94 = vpop.f32.mrf.mxu0
    %v95 = vadd.f32 %v42, %v94
    %v96 = vpop.f32.mrf.mxu0
    %v97 = vpop.f32.mrf.mxu0
    %v98 = vadd.f32 %v42, %v97
    %v99 = vpop.f32.mrf.mxu0
    %100 = vdwg.mxu0
    %v101 = vlaneseq
    %v102 = vand.u32 %v101, 127
    %s103 = smul.u32 0, 16
    %v104 = vstv %s103
    %v105 = vadd.s32 %v102, %v104
    %v106 = vld [vmem:[#allocation4] sm:$0xff]
    %v107 = vld [vmem:[#allocation4 + $0x8] sm:$0xff]
    %v108 = vld [vmem:[%s3] sm:$0xff]
    %v109 = vld [vmem:[%s3 + $0x8] sm:$0xff]
    %110 = vset.pattern.permute.xlu0 0
    %111 = vperm.xlu0 %110, %v108
    %v112 = vpop.permute.xlu0 %111
    %113 = vset.pattern.permute.xlu0 0
    %114 = vperm.xlu0 %113, %v109
    %v115 = vpop.permute.xlu0 %114
    %vm116 = vcmp.eq.s32.totalorder %v105, %v112
    %vm117 = vcmp.eq.s32.totalorder %v105, %v115
    %v118 = vsel %vm116, %v95, 0.0
    %v119 = vsel %vm117, %v98, 0.0
    %vm120 = vcmask 130048
    %v121 = vsel %vm120, %v118, 0.0
    %122 = vadd.xlane.f32.xlu0 %v121
    %v123 = vpop.xlane.xlu0 %122
    %v124 = vsel %vm120, %v119, 0.0
    %125 = vadd.xlane.f32.xlu0 %v124
    %v126 = vpop.xlane.xlu0 %125
    %v127 = vadd.f32 %v106, %v123
    %v128 = vadd.f32 %v107, %v126
    %vm129 = vcmask 7168
    %130 = vst.msk [vmem:[#allocation4] sm:$0xff] %vm129, %v127
    %131 = vst.msk [vmem:[#allocation4 + $0x8] sm:$0xff] %vm129, %v128
    %v132 = vld [vmem:[#allocation2] sm:$0xff]
    %v133 = vld [vmem:[#allocation2 + $0x8] sm:$0xff]
    %v134 = vsel %vm120, %v95, -inf
    %135 = vmax.xlane.f32.xlu0 %v134
    %v136 = vpop.xlane.xlu0 %135
    %v137 = vsel %vm120, %v98, -inf
    %138 = vmax.xlane.f32.xlu0 %v137
    %v139 = vpop.xlane.xlu0 %138
    %v140 = vmax.f32 %v132, %v136
    %v141 = vmax.f32 %v133, %v139
    %v142 = vld [vmem:[#allocation3] sm:$0xff]
    %v143 = vld [vmem:[#allocation3 + $0x8] sm:$0xff]
    %v144 = vsub.f32 %v132, %v140
    %v145 = vsub.f32 %v133, %v141
    %v146 = vmul.f32 %v144, 1.442695
    %v147 = vpow.pop %v146
    %v148 = vmul.f32 %v145, 1.442695
    %v149 = vpow.pop %v148
    %v150 = vmul.f32 %v142, %v147
    %v151 = vmul.f32 %v143, %v149
    %153 = vset.pattern.permute.xlu0 0
    %154 = vperm.xlu0 %153, %v140
    %v155 = vpop.permute.xlu0 %154
    %158 = vset.pattern.permute.xlu0 0
    %159 = vperm.xlu0 %158, %v141
    %v160 = vpop.permute.xlu0 %159
    %v162 = vsub.f32 %v95, %v155
    %v163 = vsub.f32 %v98, %v160
    %v164 = vmul.f32 %v162, 1.442695
    %v165 = vpow.pop %v164
    %v166 = vmul.f32 %v163, 1.442695
    %v167 = vpow.pop %v166
    %v168 = vsel %vm120, %v165, 0.0
    %169 = vadd.xlane.f32.xlu0 %v168
    %v170 = vpop.xlane.xlu0 %169
    %v171 = vsel %vm120, %v167, 0.0
    %172 = vadd.xlane.f32.xlu0 %v171
    %v173 = vpop.xlane.xlu0 %172
    %v174 = vadd.f32 %v150, %v170
    %v175 = vadd.f32 %v151, %v173
    %176 = vst.msk [vmem:[#allocation3] sm:$0xff] %vm129, %v174
    %177 = vst.msk [vmem:[#allocation3 + $0x8] sm:$0xff] %vm129, %v175
    %178 = vst.msk [vmem:[#allocation2] sm:$0xff] %vm129, %v140
    %179 = vst.msk [vmem:[#allocation2 + $0x8] sm:$0xff] %vm129, %v141
    // Predicated region
    $region22: #{autoregressive_loss.5} parent=1 // pred_check
      %p180 = pneg %p19
    $region23: #{autoregressive_loss.5} parent=1 // pred_check_branch
      %182 = sbr.rel (%p180) target = $region25
    $region24: #{autoregressive_loss.5} parent=1 // pred_region
      %v183 = vld [vmem:[#allocation2] sm:$0xff]
      %v184 = vld [vmem:[#allocation2 + $0x8] sm:$0xff]
      %v185 = vld [vmem:[#allocation3] sm:$0xff]
      %v186 = vld [vmem:[#allocation3 + $0x8] sm:$0xff]
      %v187 = vlog2.pop %v185
      %v188 = vmul.f32 %v187, 0.6931472
      %v189 = vlog2.pop %v186
      %v190 = vmul.f32 %v189, 0.6931472
      %v191 = vadd.f32 %v183, %v188
      %v192 = vadd.f32 %v184, %v190
      %v193 = vld [vmem:[#allocation4] sm:$0xff]
      %v194 = vld [vmem:[#allocation4 + $0x8] sm:$0xff]
      %v195 = vsub.f32 %v191, %v193
      %v196 = vsub.f32 %v192, %v194
      %v197 = vsel %vm129, %v195, 0.0
      %v198 = vsel %vm129, %v196, 0.0
      %v199 = vadd.f32 %v197, %v198
      %v200 = vrot.slane %v199, 4
      %v201 = vadd.f32 %v199, %v200
      %v202 = vrot.slane %v201, 2
      %v203 = vadd.f32 %v201, %v202
      %v204 = vrot.slane %v203, 1
      %v205 = vadd.f32 %v203, %v204
      %v206 = vmul.f32 %v205, 0.0625
      %vm207 = vcmask 0
      %208 = vst.msk [vmem:[#allocation5] sm:$0x1] %vm207, %v206
    $region25: #{autoregressive_loss.5} parent=1 // pred_fallthru
      _
    // Predicated region
    $region26: #{autoregressive_loss.5} parent=1 // pred_check
      _
    $region27: #{autoregressive_loss.5} parent=1 // pred_check_branch
      %210 = sbr.rel (0) target = $region29
    $region28: #{autoregressive_loss.5} parent=1 // pred_region
      %s212 = ssub.s32 16, 16
      %213 = vsyncadd [#allocation6], %s212
      %s215 = sshll.u32 [#allocation5], 4
      %s216 = int_to_ptr.vmem [resolvable:$true] %s215
      %218 = dma.vmem_to_hbm [thread:$0]  %s216, 16, %s4, [#allocation6]
    $region29: #{autoregressive_loss.5} parent=1 // pred_fallthru
      _
    // Predicated region
    $region30: #{autoregressive_loss.5} parent=1 // pred_check
      _
    $region31: #{autoregressive_loss.5} parent=1 // pred_check_branch
      %220 = sbr.rel (0) target = $region33
    $region32: #{autoregressive_loss.5} parent=1 // pred_region
      %221 = dma.done [#allocation6], 16
    $region33: #{autoregressive_loss.5} parent=1 // pred_fallthru
      _
    %222 = vsyncpa [#allocation6], 1

// kernel: autoregressive_loss.3
$region0: #{autoregressive_loss.3}
  #allocation0 [shape = 'u32[]', space=smem, size = 0x4, offset = 0x4, fixed_abs, tag = 'smem constant byte address 0x4 - core index']
  #allocation1 [shape = 'u32[144,128]{1,0:T(1,128)}', space=vmem, size = 0x12000, scoped, tag = 'internal scratch']
  %s0 = inlined_call_operand.vmem [shape: f32[2,8,32], index: 0, kind: input, shape index: {}, may-alias: {0,14}]
  %s1 = inlined_call_operand.vmem [shape: f32[8,32], index: 1, kind: input, shape index: {}]
  %s2 = inlined_call_operand.vmem [shape: f32[1,32], index: 2, kind: input, shape index: {}]
  %s3 = inlined_call_operand.vmem [shape: f32[1,32], index: 3, kind: input, shape index: {}]
  %s4 = inlined_call_operand.vmem [shape: f32[1,32], index: 4, kind: input, shape index: {}]
  %s5 = inlined_call_operand.vmem [shape: f32[1,32], index: 5, kind: input, shape index: {}]
  %s6 = inlined_call_operand.vmem [shape: bf16[32,32], index: 6, kind: input, shape index: {}]
  %s7 = inlined_call_operand.vmem [shape: bf16[32,32], index: 7, kind: input, shape index: {}]
  %s8 = inlined_call_operand.vmem [shape: bf16[32,32], index: 8, kind: input, shape index: {}]
  %s9 = inlined_call_operand.vmem [shape: bf16[32,32], index: 9, kind: input, shape index: {}]
  %s10 = inlined_call_operand.vmem [shape: bf16[32,64], index: 10, kind: input, shape index: {}]
  %s11 = inlined_call_operand.vmem [shape: f32[1,64], index: 11, kind: input, shape index: {}]
  %s12 = inlined_call_operand.vmem [shape: bf16[64,32], index: 12, kind: input, shape index: {}]
  %s13 = inlined_call_operand.vmem [shape: f32[1,32], index: 13, kind: input, shape index: {}]
  %s14 = inlined_call_operand.vmem [shape: f32[2,8,32], index: 14, kind: output, shape index: {}, may-alias: {0,14}]
  %s15 = sld [smem:[#allocation0]]
  $region89: #{autoregressive_loss.3} parent=0
    _
  %s17 = ssub.s32 1, %s15
  %s18 = scalar_select 0, %s17, %s15
  loop: start=0, step=1, limit=4
  $region2: #{autoregressive_loss.3} parent=0 // loop_pre_header
    _
  $region3: #{autoregressive_loss.3} parent=0 // loop_header
    %s20 = sphi 0, %s24
    %p21 = scmp.ge.s32.totalorder %s20, 4
    %s30 = sphi 0, %s32
    %s33 = sphi 0, %s30
    %s34 = sphi 0, %s33
    %s50 = sphi 0, %s34
    %s54 = sphi 0, %s54
    %s56 = sphi 0, %s54
    %s57 = sphi 0, %s56
    %s71 = sphi 0, %s57
    %s75 = sphi 0, %s75
    %s77 = sphi 0, %s75
    %s78 = sphi 0, %s77
    %s92 = sphi 0, %s78
    %s96 = sphi 0, %s96
    %s98 = sphi 0, %s96
    %s99 = sphi 0, %s98
    %s113 = sphi 0, %s99
    %s117 = sphi 0, %s117
    %s119 = sphi 0, %s117
    %s120 = sphi 0, %s119
    %s134 = sphi 0, %s120
    %s138 = sphi 0, %s138
    %s140 = sphi 0, %s138
    %s141 = sphi 0, %s140
    %s155 = sphi 0, %s141
    %s159 = sphi 0, %s159
    %s161 = sphi 0, %s159
    %s162 = sphi 0, %s161
    %s176 = sphi 0, %s162
    %s180 = sphi 0, %s180
    %s182 = sphi 0, %s180
    %s183 = sphi 0, %s182
    %s197 = sphi 0, %s183
    %s201 = sphi 0, %s201
    %s203 = sphi 0, %s201
    %s204 = sphi 0, %s203
    %s218 = sphi 0, %s204
    %s222 = sphi 0, %s222
    %s224 = sphi 0, %s222
    %s225 = sphi 0, %s224
    %s239 = sphi 0, %s225
    %s243 = sphi 0, %s243
    %s245 = sphi 0, %s243
    %s246 = sphi 0, %s245
    %s260 = sphi 0, %s246
    %s264 = sphi 0, %s264
    %s266 = sphi 0, %s264
    %s267 = sphi 0, %s266
    %s281 = sphi 0, %s267
    %s285 = sphi 0, %s285
    %s287 = sphi 0, %s285
    %s288 = sphi 0, %s287
    %s302 = sphi 0, %s288
    %s306 = sphi 0, %s306
    %s308 = sphi 0, %s306
    %s309 = sphi 0, %s308
    %s323 = sphi 0, %s309
    %s329 = sphi 0, %s331
    %s332 = sphi 0, %s329
    %s333 = sphi 0, %s332
    %s349 = sphi 0, %s333
  $region4: #{autoregressive_loss.3} parent=0 // loop_header_branch
    %23 = sbr.rel (%p21) target = $region8
  $region5: #{autoregressive_loss.3} parent=0 // loop_body
    %s25 = ssub.s32 %s20, 1
    %s26 = ssub.s32 %s20, 2
    %s27 = sadd.s32 %s20, 1
    %s28 = ssub.s32 %s20, %s27
    %p29 = scmp.eq.s32.totalorder %s28, 0
    %s31 = sadd.s32 %s30, 1
    %s32 = scalar_select %p29, %s30, %s31
    %p35 = pneg %p29
    %p36 = scmp.eq.s32.totalorder %s20, 1
    %p37 = por %p35, %p36
    %p38 = scmp.ne.s32.totalorder %s30, %s33
    %p39 = scmp.eq.s32.totalorder %s20, 0
    %p40 = por %p38, %p39
    %p41 = scmp.ne.s32.totalorder %s30, %s33
    %p42 = scmp.eq.s32.totalorder %s25, 1
    %p43 = por %p41, %p42
    %p44 = scmp.ne.s32.totalorder %s33, %s34
    %p45 = scmp.eq.s32.totalorder %s25, 0
    %p46 = por %p44, %p45
    %p47 = scmp.ne.s32.totalorder %s33, %s34
    %p48 = scmp.eq.s32.totalorder %s26, 1
    %p49 = por %p47, %p48
    %p51 = scmp.ne.s32.totalorder %s34, %s50
    %p52 = scmp.eq.s32.totalorder %s26, 0
    %p53 = por %p51, %p52
    %s55 = sadd.s32 %s54, 1
    %p58 = scmp.eq.s32.totalorder %s20, 1
    %p59 = scmp.ne.s32.totalorder %s54, %s56
    %p60 = scmp.eq.s32.totalorder %s20, 0
    %p61 = por %p59, %p60
    %p62 = scmp.ne.s32.totalorder %s54, %s56
    %p63 = scmp.eq.s32.totalorder %s25, 1
    %p64 = por %p62, %p63
    %p65 = scmp.ne.s32.totalorder %s56, %s57
    %p66 = scmp.eq.s32.totalorder %s25, 0
    %p67 = por %p65, %p66
    %p68 = scmp.ne.s32.totalorder %s56, %s57
    %p69 = scmp.eq.s32.totalorder %s26, 1
    %p70 = por %p68, %p69
    %p72 = scmp.ne.s32.totalorder %s57, %s71
    %p73 = scmp.eq.s32.totalorder %s26, 0
    %p74 = por %p72, %p73
    %s76 = sadd.s32 %s75, 1
    %p79 = scmp.eq.s32.totalorder %s20, 1
    %p80 = scmp.ne.s32.totalorder %s75, %s77
    %p81 = scmp.eq.s32.totalorder %s20, 0
    %p82 = por %p80, %p81
    %p83 = scmp.ne.s32.totalorder %s75, %s77
    %p84 = scmp.eq.s32.totalorder %s25, 1
    %p85 = por %p83, %p84
    %p86 = scmp.ne.s32.totalorder %s77, %s78
    %p87 = scmp.eq.s32.totalorder %s25, 0
    %p88 = por %p86, %p87
    %p89 = scmp.ne.s32.totalorder %s77, %s78
    %p90 = scmp.eq.s32.totalorder %s26, 1
    %p91 = por %p89, %p90
    %p93 = scmp.ne.s32.totalorder %s78, %s92
    %p94 = scmp.eq.s32.totalorder %s26, 0
    %p95 = por %p93, %p94
    %s97 = sadd.s32 %s96, 1
    %p100 = scmp.eq.s32.totalorder %s20, 1
    %p101 = scmp.ne.s32.totalorder %s96, %s98
    %p102 = scmp.eq.s32.totalorder %s20, 0
    %p103 = por %p101, %p102
    %p104 = scmp.ne.s32.totalorder %s96, %s98
    %p105 = scmp.eq.s32.totalorder %s25, 1
    %p106 = por %p104, %p105
    %p107 = scmp.ne.s32.totalorder %s98, %s99
    %p108 = scmp.eq.s32.totalorder %s25, 0
    %p109 = por %p107, %p108
    %p110 = scmp.ne.s32.totalorder %s98, %s99
    %p111 = scmp.eq.s32.totalorder %s26, 1
    %p112 = por %p110, %p111
    %p114 = scmp.ne.s32.totalorder %s99, %s113
    %p115 = scmp.eq.s32.totalorder %s26, 0
    %p116 = por %p114, %p115
    %s118 = sadd.s32 %s117, 1
    %p121 = scmp.eq.s32.totalorder %s20, 1
    %p122 = scmp.ne.s32.totalorder %s117, %s119
    %p123 = scmp.eq.s32.totalorder %s20, 0
    %p124 = por %p122, %p123
    %p125 = scmp.ne.s32.totalorder %s117, %s119
    %p126 = scmp.eq.s32.totalorder %s25, 1
    %p127 = por %p125, %p126
    %p128 = scmp.ne.s32.totalorder %s119, %s120
    %p129 = scmp.eq.s32.totalorder %s25, 0
    %p130 = por %p128, %p129
    %p131 = scmp.ne.s32.totalorder %s119, %s120
    %p132 = scmp.eq.s32.totalorder %s26, 1
    %p133 = por %p131, %p132
    %p135 = scmp.ne.s32.totalorder %s120, %s134
    %p136 = scmp.eq.s32.totalorder %s26, 0
    %p137 = por %p135, %p136
    %s139 = sadd.s32 %s138, 1
    %p142 = scmp.eq.s32.totalorder %s20, 1
    %p143 = scmp.ne.s32.totalorder %s138, %s140
    %p144 = scmp.eq.s32.totalorder %s20, 0
    %p145 = por %p143, %p144
    %p146 = scmp.ne.s32.totalorder %s138, %s140
    %p147 = scmp.eq.s32.totalorder %s25, 1
    %p148 = por %p146, %p147
    %p149 = scmp.ne.s32.totalorder %s140, %s141
    %p150 = scmp.eq.s32.totalorder %s25, 0
    %p151 = por %p149, %p150
    %p152 = scmp.ne.s32.totalorder %s140, %s141
    %p153 = scmp.eq.s32.totalorder %s26, 1
    %p154 = por %p152, %p153
    %p156 = scmp.ne.s32.totalorder %s141, %s155
    %p157 = scmp.eq.s32.totalorder %s26, 0
    %p158 = por %p156, %p157
    %s160 = sadd.s32 %s159, 1
    %p163 = scmp.eq.s32.totalorder %s20, 1
    %p164 = scmp.ne.s32.totalorder %s159, %s161
    %p165 = scmp.eq.s32.totalorder %s20, 0
    %p166 = por %p164, %p165
    %p167 = scmp.ne.s32.totalorder %s159, %s161
    %p168 = scmp.eq.s32.totalorder %s25, 1
    %p169 = por %p167, %p168
    %p170 = scmp.ne.s32.totalorder %s161, %s162
    %p171 = scmp.eq.s32.totalorder %s25, 0
    %p172 = por %p170, %p171
    %p173 = scmp.ne.s32.totalorder %s161, %s162
    %p174 = scmp.eq.s32.totalorder %s26, 1
    %p175 = por %p173, %p174
    %p177 = scmp.ne.s32.totalorder %s162, %s176
    %p178 = scmp.eq.s32.totalorder %s26, 0
    %p179 = por %p177, %p178
    %s181 = sadd.s32 %s180, 1
    %p184 = scmp.eq.s32.totalorder %s20, 1
    %p185 = scmp.ne.s32.totalorder %s180, %s182
    %p186 = scmp.eq.s32.totalorder %s20, 0
    %p187 = por %p185, %p186
    %p188 = scmp.ne.s32.totalorder %s180, %s182
    %p189 = scmp.eq.s32.totalorder %s25, 1
    %p190 = por %p188, %p189
    %p191 = scmp.ne.s32.totalorder %s182, %s183
    %p192 = scmp.eq.s32.totalorder %s25, 0
    %p193 = por %p191, %p192
    %p194 = scmp.ne.s32.totalorder %s182, %s183
    %p195 = scmp.eq.s32.totalorder %s26, 1
    %p196 = por %p194, %p195
    %p198 = scmp.ne.s32.totalorder %s183, %s197
    %p199 = scmp.eq.s32.totalorder %s26, 0
    %p200 = por %p198, %p199
    %s202 = sadd.s32 %s201, 1
    %p205 = scmp.eq.s32.totalorder %s20, 1
    %p206 = scmp.ne.s32.totalorder %s201, %s203
    %p207 = scmp.eq.s32.totalorder %s20, 0
    %p208 = por %p206, %p207
    %p209 = scmp.ne.s32.totalorder %s201, %s203
    %p210 = scmp.eq.s32.totalorder %s25, 1
    %p211 = por %p209, %p210
    %p212 = scmp.ne.s32.totalorder %s203, %s204
    %p213 = scmp.eq.s32.totalorder %s25, 0
    %p214 = por %p212, %p213
    %p215 = scmp.ne.s32.totalorder %s203, %s204
    %p216 = scmp.eq.s32.totalorder %s26, 1
    %p217 = por %p215, %p216
    %p219 = scmp.ne.s32.totalorder %s204, %s218
    %p220 = scmp.eq.s32.totalorder %s26, 0
    %p221 = por %p219, %p220
    %s223 = sadd.s32 %s222, 1
    %p226 = scmp.eq.s32.totalorder %s20, 1
    %p227 = scmp.ne.s32.totalorder %s222, %s224
    %p228 = scmp.eq.s32.totalorder %s20, 0
    %p229 = por %p227, %p228
    %p230 = scmp.ne.s32.totalorder %s222, %s224
    %p231 = scmp.eq.s32.totalorder %s25, 1
    %p232 = por %p230, %p231
    %p233 = scmp.ne.s32.totalorder %s224, %s225
    %p234 = scmp.eq.s32.totalorder %s25, 0
    %p235 = por %p233, %p234
    %p236 = scmp.ne.s32.totalorder %s224, %s225
    %p237 = scmp.eq.s32.totalorder %s26, 1
    %p238 = por %p236, %p237
    %p240 = scmp.ne.s32.totalorder %s225, %s239
    %p241 = scmp.eq.s32.totalorder %s26, 0
    %p242 = por %p240, %p241
    %s244 = sadd.s32 %s243, 1
    %p247 = scmp.eq.s32.totalorder %s20, 1
    %p248 = scmp.ne.s32.totalorder %s243, %s245
    %p249 = scmp.eq.s32.totalorder %s20, 0
    %p250 = por %p248, %p249
    %p251 = scmp.ne.s32.totalorder %s243, %s245
    %p252 = scmp.eq.s32.totalorder %s25, 1
    %p253 = por %p251, %p252
    %p254 = scmp.ne.s32.totalorder %s245, %s246
    %p255 = scmp.eq.s32.totalorder %s25, 0
    %p256 = por %p254, %p255
    %p257 = scmp.ne.s32.totalorder %s245, %s246
    %p258 = scmp.eq.s32.totalorder %s26, 1
    %p259 = por %p257, %p258
    %p261 = scmp.ne.s32.totalorder %s246, %s260
    %p262 = scmp.eq.s32.totalorder %s26, 0
    %p263 = por %p261, %p262
    %s265 = sadd.s32 %s264, 1
    %p268 = scmp.eq.s32.totalorder %s20, 1
    %p269 = scmp.ne.s32.totalorder %s264, %s266
    %p270 = scmp.eq.s32.totalorder %s20, 0
    %p271 = por %p269, %p270
    %p272 = scmp.ne.s32.totalorder %s264, %s266
    %p273 = scmp.eq.s32.totalorder %s25, 1
    %p274 = por %p272, %p273
    %p275 = scmp.ne.s32.totalorder %s266, %s267
    %p276 = scmp.eq.s32.totalorder %s25, 0
    %p277 = por %p275, %p276
    %p278 = scmp.ne.s32.totalorder %s266, %s267
    %p279 = scmp.eq.s32.totalorder %s26, 1
    %p280 = por %p278, %p279
    %p282 = scmp.ne.s32.totalorder %s267, %s281
    %p283 = scmp.eq.s32.totalorder %s26, 0
    %p284 = por %p282, %p283
    %s286 = sadd.s32 %s285, 1
    %p289 = scmp.eq.s32.totalorder %s20, 1
    %p290 = scmp.ne.s32.totalorder %s285, %s287
    %p291 = scmp.eq.s32.totalorder %s20, 0
    %p292 = por %p290, %p291
    %p293 = scmp.ne.s32.totalorder %s285, %s287
    %p294 = scmp.eq.s32.totalorder %s25, 1
    %p295 = por %p293, %p294
    %p296 = scmp.ne.s32.totalorder %s287, %s288
    %p297 = scmp.eq.s32.totalorder %s25, 0
    %p298 = por %p296, %p297
    %p299 = scmp.ne.s32.totalorder %s287, %s288
    %p300 = scmp.eq.s32.totalorder %s26, 1
    %p301 = por %p299, %p300
    %p303 = scmp.ne.s32.totalorder %s288, %s302
    %p304 = scmp.eq.s32.totalorder %s26, 0
    %p305 = por %p303, %p304
    %s307 = sadd.s32 %s306, 1
    %p310 = scmp.eq.s32.totalorder %s20, 1
    %p311 = scmp.ne.s32.totalorder %s306, %s308
    %p312 = scmp.eq.s32.totalorder %s20, 0
    %p313 = por %p311, %p312
    %p314 = scmp.ne.s32.totalorder %s306, %s308
    %p315 = scmp.eq.s32.totalorder %s25, 1
    %p316 = por %p314, %p315
    %p317 = scmp.ne.s32.totalorder %s308, %s309
    %p318 = scmp.eq.s32.totalorder %s25, 0
    %p319 = por %p317, %p318
    %p320 = scmp.ne.s32.totalorder %s308, %s309
    %p321 = scmp.eq.s32.totalorder %s26, 1
    %p322 = por %p320, %p321
    %p324 = scmp.ne.s32.totalorder %s309, %s323
    %p325 = scmp.eq.s32.totalorder %s26, 0
    %p326 = por %p324, %p325
    %s327 = ssub.s32 %s20, %s27
    %p328 = scmp.eq.s32.totalorder %s327, 0
    %s330 = sadd.s32 %s329, 1
    %s331 = scalar_select %p328, %s329, %s330
    %p334 = pneg %p328
    %p335 = scmp.eq.s32.totalorder %s20, 1
    %p336 = por %p334, %p335
    %p337 = scmp.ne.s32.totalorder %s329, %s332
    %p338 = scmp.eq.s32.totalorder %s20, 0
    %p339 = por %p337, %p338
    %p340 = scmp.ne.s32.totalorder %s329, %s332
    %p341 = scmp.eq.s32.totalorder %s25, 1
    %p342 = por %p340, %p341
    %p343 = scmp.ne.s32.totalorder %s332, %s333
    %p344 = scmp.eq.s32.totalorder %s25, 0
    %p345 = por %p343, %p344
    %p346 = scmp.ne.s32.totalorder %s332, %s333
    %p347 = scmp.eq.s32.totalorder %s26, 1
    %p348 = por %p346, %p347
    %p350 = scmp.ne.s32.totalorder %s333, %s349
    %p351 = scmp.eq.s32.totalorder %s26, 0
    %p352 = por %p350, %p351
    %p353 = scmp.le.s32.totalorder 1, %s20
    %p354 = scmp.lt.s32.totalorder %s20, 3
    %p355 = pnand %p353, %p354
    %p356 = pneg %p355
    // Predicated region
    $region9: #{autoregressive_loss.3} parent=5 // pred_check
      _
    $region10: #{autoregressive_loss.3} parent=5 // pred_check_branch
      %358 = sbr.rel (%p355) target = $region12
    $region11: #{autoregressive_loss.3} parent=5 // pred_region
      %s359 = ssub.s32 %s20, 1
      // Predicated region
      $region13: #{autoregressive_loss.3} parent=11 // pred_check
        %p360 = pneg %p67
      $region14: #{autoregressive_loss.3} parent=11 // pred_check_branch
        %362 = sbr.rel (%p360) target = $region16
      $region15: #{autoregressive_loss.3} parent=11 // pred_region
        _
      $region16: #{autoregressive_loss.3} parent=11 // pred_fallthru
        _
      // Predicated region
      $region17: #{autoregressive_loss.3} parent=11 // pred_check
        %p363 = pneg %p88
      $region18: #{autoregressive_loss.3} parent=11 // pred_check_branch
        %365 = sbr.rel (%p363) target = $region20
      $region19: #{autoregressive_loss.3} parent=11 // pred_region
        _
      $region20: #{autoregressive_loss.3} parent=11 // pred_fallthru
        _
      // Predicated region
      $region21: #{autoregressive_loss.3} parent=11 // pred_check
        %p366 = pneg %p109
      $region22: #{autoregressive_loss.3} parent=11 // pred_check_branch
        %368 = sbr.rel (%p366) target = $region24
      $region23: #{autoregressive_loss.3} parent=11 // pred_region
        _
      $region24: #{autoregressive_loss.3} parent=11 // pred_fallthru
        _
      // Predicated region
      $region25: #{autoregressive_loss.3} parent=11 // pred_check
        %p369 = pneg %p130
      $region26: #{autoregressive_loss.3} parent=11 // pred_check_branch
        %371 = sbr.rel (%p369) target = $region28
      $region27: #{autoregressive_loss.3} parent=11 // pred_region
        _
      $region28: #{autoregressive_loss.3} parent=11 // pred_fallthru
        _
      // Predicated region
      $region29: #{autoregressive_loss.3} parent=11 // pred_check
        %p372 = pneg %p151
      $region30: #{autoregressive_loss.3} parent=11 // pred_check_branch
        %374 = sbr.rel (%p372) target = $region32
      $region31: #{autoregressive_loss.3} parent=11 // pred_region
        _
      $region32: #{autoregressive_loss.3} parent=11 // pred_fallthru
        _
      // Predicated region
      $region33: #{autoregressive_loss.3} parent=11 // pred_check
        %p375 = pneg %p172
      $region34: #{autoregressive_loss.3} parent=11 // pred_check_branch
        %377 = sbr.rel (%p375) target = $region36
      $region35: #{autoregressive_loss.3} parent=11 // pred_region
        _
      $region36: #{autoregressive_loss.3} parent=11 // pred_fallthru
        _
      // Predicated region
      $region37: #{autoregressive_loss.3} parent=11 // pred_check
        %p378 = pneg %p193
      $region38: #{autoregressive_loss.3} parent=11 // pred_check_branch
        %380 = sbr.rel (%p378) target = $region40
      $region39: #{autoregressive_loss.3} parent=11 // pred_region
        _
      $region40: #{autoregressive_loss.3} parent=11 // pred_fallthru
        _
      // Predicated region
      $region41: #{autoregressive_loss.3} parent=11 // pred_check
        %p381 = pneg %p214
      $region42: #{autoregressive_loss.3} parent=11 // pred_check_branch
        %383 = sbr.rel (%p381) target = $region44
      $region43: #{autoregressive_loss.3} parent=11 // pred_region
        _
      $region44: #{autoregressive_loss.3} parent=11 // pred_fallthru
        _
      // Predicated region
      $region45: #{autoregressive_loss.3} parent=11 // pred_check
        %p384 = pneg %p235
      $region46: #{autoregressive_loss.3} parent=11 // pred_check_branch
        %386 = sbr.rel (%p384) target = $region48
      $region47: #{autoregressive_loss.3} parent=11 // pred_region
        _
      $region48: #{autoregressive_loss.3} parent=11 // pred_fallthru
        _
      // Predicated region
      $region49: #{autoregressive_loss.3} parent=11 // pred_check
        %p387 = pneg %p256
      $region50: #{autoregressive_loss.3} parent=11 // pred_check_branch
        %389 = sbr.rel (%p387) target = $region52
      $region51: #{autoregressive_loss.3} parent=11 // pred_region
        _
      $region52: #{autoregressive_loss.3} parent=11 // pred_fallthru
        _
      // Predicated region
      $region53: #{autoregressive_loss.3} parent=11 // pred_check
        %p390 = pneg %p277
      $region54: #{autoregressive_loss.3} parent=11 // pred_check_branch
        %392 = sbr.rel (%p390) target = $region56
      $region55: #{autoregressive_loss.3} parent=11 // pred_region
        _
      $region56: #{autoregressive_loss.3} parent=11 // pred_fallthru
        _
      // Predicated region
      $region57: #{autoregressive_loss.3} parent=11 // pred_check
        %p393 = pneg %p298
      $region58: #{autoregressive_loss.3} parent=11 // pred_check_branch
        %395 = sbr.rel (%p393) target = $region60
      $region59: #{autoregressive_loss.3} parent=11 // pred_region
        _
      $region60: #{autoregressive_loss.3} parent=11 // pred_fallthru
        _
      // Predicated region
      $region61: #{autoregressive_loss.3} parent=11 // pred_check
        %p396 = pneg %p319
      $region62: #{autoregressive_loss.3} parent=11 // pred_check_branch
        %398 = sbr.rel (%p396) target = $region64
      $region63: #{autoregressive_loss.3} parent=11 // pred_region
        _
      $region64: #{autoregressive_loss.3} parent=11 // pred_fallthru
        _
    $region12: #{autoregressive_loss.3} parent=5 // pred_fallthru
      _
    %p399 = scmp.lt.s32.totalorder %s20, 2
    // Predicated region
    $region65: #{autoregressive_loss.3} parent=5 // pred_check
      %p400 = pneg %p399
    $region66: #{autoregressive_loss.3} parent=5 // pred_check_branch
      %402 = sbr.rel (%p400) target = $region68
    $region67: #{autoregressive_loss.3} parent=5 // pred_region
      // Predicated region
      $region69: #{autoregressive_loss.3} parent=67 // pred_check
        %p403 = pneg %p40
      $region70: #{autoregressive_loss.3} parent=67 // pred_check_branch
        %405 = sbr.rel (%p403) target = $region72
      $region71: #{autoregressive_loss.3} parent=67 // pred_region
        %p406 = scmp.lt.s32.totalorder %s20, 1
        %s407 = scalar_select %p406, %s20, 1
        %s408 = smul.addr %s407, 8
        %s409 = scalar_lea.vmem %s0, %s408
      $region72: #{autoregressive_loss.3} parent=67 // pred_fallthru
        _
    $region68: #{autoregressive_loss.3} parent=5 // pred_fallthru
      _
    %p410 = scmp.le.s32.totalorder 1, %s20
    %p411 = scmp.lt.s32.totalorder %s20, 3
    %p412 = pnand %p410, %p411
    %p413 = pneg %p412
    // Predicated region
    $region73: #{autoregressive_loss.3} parent=5 // pred_check
      _
    $region74: #{autoregressive_loss.3} parent=5 // pred_check_branch
      %415 = sbr.rel (%p412) target = $region76
    $region75: #{autoregressive_loss.3} parent=5 // pred_region
      %s416 = ssub.s32 %s20, 1
      %p417 = scmp.lt.s32.totalorder %s25, 1
      %s418 = scalar_select %p417, %s25, 1
      %s419 = smul.addr %s418, 8
      %s420 = scalar_lea.vmem %s0, %s419
      %p421 = pneg %p46
      %p422 = pneg %p43
      %p423 = pneg %p67
      %p424 = pneg %p64
      %p425 = pneg %p88
      %p426 = pneg %p85
      %p427 = pneg %p109
      %p428 = pneg %p106
      %p429 = pneg %p130
      %p430 = pneg %p127
      %p431 = pneg %p151
      %p432 = pneg %p148
      %p433 = pneg %p172
      %p434 = pneg %p169
      %p435 = pneg %p193
      %p436 = pneg %p190
      %p437 = pneg %p214
      %p438 = pneg %p211
      %p439 = pneg %p235
      %p440 = pneg %p232
      %p441 = pneg %p256
      %p442 = pneg %p253
      %p443 = pneg %p277
      %p444 = pneg %p274
      %p445 = pneg %p298
      %p446 = pneg %p295
      %p447 = pneg %p319
      %p448 = pneg %p316
      %p449 = pneg %p345
      %p450 = pneg %p342
      %p451 = scmp.lt.s32.totalorder %s25, 1
      %s452 = scalar_select %p451, %s25, 1
      %s453 = smul.addr %s452, 8
      %s454 = scalar_lea.vmem %s14, %s453
      %p455 = scmp.lt.s32.totalorder %s25, 1
      %s456 = scalar_select %p455, %s25, 1
      %s457 = smul.addr %s456, 8
      %s458 = scalar_lea.vmem %s0, %s457
      %p459 = scmp.lt.s32.totalorder %s25, 1
      %s460 = scalar_select %p459, %s25, 1
      %s461 = smul.addr %s460, 8
      %s462 = scalar_lea.vmem %s14, %s461
      %v464 = vld [vmem:[%s458] sm:$0xff]
      %v465 = vld [vmem:[%s1] sm:$0xff]
      %v466 = vadd.f32 %v464, %v465
      %v467 = vld [vmem:[%s2] sm:$0x1]
      %v468 = vld [vmem:[%s3] sm:$0x1]
      %vm469 = vcmask 261120
      %v470 = vsel %vm469, %v466, 0.0
      %471 = vadd.xlane.f32.xlu0 %v470
      %v472 = vpop.xlane.xlu0 %471
      %v473 = vrcp.pop 32.0
      %v474 = vmul.f32 %v472, %v473
      %v475 = vsub.f32 %v466, %v474
      %v476 = vmul.f32 %v475, %v475
      %v477 = vsel %vm469, %v476, 0.0
      %478 = vadd.xlane.f32.xlu0 %v477
      %v479 = vpop.xlane.xlu0 %478
      %v480 = vmul.f32 %v479, %v473
      %v481 = vadd.f32 %v480, 1e-05
      %v482 = vrsqrt.pop %v481
      %v483 = vmul.f32 %v475, %v482
      %v485 = vlaneseq
      %v486 = vshrl.u32 %v485, 7
      %v487 = vsub.s32 0, %v486
      %v488 = vrot.slane %v467, %v487
      %v490 = vmul.f32 %v483, %v488
      %v492 = vlaneseq
      %v493 = vshrl.u32 %v492, 7
      %v494 = vsub.s32 0, %v493
      %v495 = vrot.slane %v468, %v494
      %v497 = vadd.f32 %v490, %v495
      %v498 = vpack.c.bf16 %v497, %v497
      %v499 = vld [vmem:[%s4] sm:$0x1]
      %v500 = vld [vmem:[%s5] sm:$0x1]
      %v502 = vlaneseq
      %v503 = vshrl.u32 %v502, 7
      %v504 = vsub.s32 0, %v503
      %v505 = vrot.slane %v499, %v504
      %v507 = vmul.f32 %v483, %v505
      %v509 = vlaneseq
      %v510 = vshrl.u32 %v509, 7
      %v511 = vsub.s32 0, %v510
      %v512 = vrot.slane %v500, %v511
      %v514 = vadd.f32 %v507, %v512
      %v515 = vpack.c.bf16 %v514, %v514
      %v516 = vld [vmem:[%s6] sm:$0xf]
      %v517 = vld [vmem:[%s6 + $0x4] sm:$0xf]
      %v518 = vld [vmem:[%s6 + $0x8] sm:$0xf]
      %v519 = vld [vmem:[%s6 + $0xc] sm:$0xf]
      %v524 = vunpack.c.l.b16 %v516
      %v525 = vunpack.c.l.b16 %v517
      %v526 = vunpack.c.l.b16 %v518
      %v527 = vunpack.c.l.b16 %v519
      %v528 = vpack.c.b16 %v525, %v524
      %v529 = vpack.c.b16 %v527, %v526
      %v533 = vsel %vm469, %v498, 0
      %535 = vmatprep.subr.bf16.mxu0 0
      %536 = vmatpush1.bf16.msra.mxu0 0
      %537 = vmatprep.subr.bf16.mxu0 0
      %538 = vmatpush1.bf16.msra.mxu0 0
      %539 = vmatprep.subr.bf16.mxu0 0
      %540 = vmatpush1.bf16.msra.mxu0 0
      %541 = vmatprep.subr.bf16.mxu0 0
      %542 = vmatpush1.bf16.msra.mxu0 0
      %543 = vmatprep.subr.bf16.mxu0 0
      %544 = vmatpush1.bf16.msra.mxu0 0
      %545 = vmatprep.subr.bf16.mxu0 0
      %546 = vmatpush1.bf16.msra.mxu0 0
      %547 = vmatprep.subr.bf16.mxu0 0
      %548 = vmatpush1.bf16.msra.mxu0 %v529
      %549 = vmatprep.subr.bf16.mxu0 0
      %550 = vmatpush1.bf16.msra.mxu0 %v528
      %551 = vmatprep.subr.bf16.mxu0 0
      %552 = vmatpush2.bf16.msra.mxu0 0
      %553 = vmatprep.subr.bf16.mxu0 0
      %554 = vmatpush2.bf16.msra.mxu0 0
      %555 = vmatprep.subr.bf16.mxu0 0
      %556 = vmatpush2.bf16.msra.mxu0 0
      %557 = vmatprep.subr.bf16.mxu0 0
      %558 = vmatpush2.bf16.msra.mxu0 0
      %559 = vmatprep.subr.bf16.mxu0 0
      %560 = vmatpush2.bf16.msra.mxu0 0
      %561 = vmatprep.subr.bf16.mxu0 0
      %562 = vmatpush2.bf16.msra.mxu0 0
      %563 = vmatprep.subr.bf16.mxu0 0
      %564 = vmatpush2.bf16.msra.mxu0 0
      %565 = vmatprep.subr.bf16.mxu0 0
      %566 = vmatpush2.bf16.msra.mxu0 0
      %567 = vmatprep.mubr.bf16.mxu0 0
      %568 = vmatmul.mubr.bf16.gmra.mxu0 %v533
      %v569 = vpop.f32.mrf.mxu0
      %v570 = vadd.f32 0.0, %v569
      %v571 = vpop.f32.mrf.mxu0
      %v572 = vpop.f32.mrf.mxu0
      %v573 = vpop.f32.mrf.mxu0
      %574 = vdwg.mxu0
      %v575 = vmul.f32 %v570, 0.25
      %v576 = vld [vmem:[%s7] sm:$0xf]
      %v577 = vld [vmem:[%s7 + $0x4] sm:$0xf]
      %v578 = vld [vmem:[%s7 + $0x8] sm:$0xf]
      %v579 = vld [vmem:[%s7 + $0xc] sm:$0xf]
      %v584 = vunpack.c.l.b16 %v576
      %v585 = vunpack.c.l.b16 %v577
      %v586 = vunpack.c.l.b16 %v578
      %v587 = vunpack.c.l.b16 %v579
      %v588 = vpack.c.b16 %v585, %v584
      %v589 = vpack.c.b16 %v587, %v586
      %v593 = vsel %vm469, %v515, 0
      %595 = vmatprep.subr.bf16.mxu0 0
      %596 = vmatpush1.bf16.msra.mxu0 0
      %597 = vmatprep.subr.bf16.mxu0 0
      %598 = vmatpush1.bf16.msra.mxu0 0
      %599 = vmatprep.subr.bf16.mxu0 0
      %600 = vmatpush1.bf16.msra.mxu0 0
      %601 = vmatprep.subr.bf16.mxu0 0
      %602 = vmatpush1.bf16.msra.mxu0 0
      %603 = vmatprep.subr.bf16.mxu0 0
      %604 = vmatpush1.bf16.msra.mxu0 0
      %605 = vmatprep.subr.bf16.mxu0 0
      %606 = vmatpush1.bf16.msra.mxu0 0
      %607 = vmatprep.subr.bf16.mxu0 0
      %608 = vmatpush1.bf16.msra.mxu0 %v589
      %609 = vmatprep.subr.bf16.mxu0 0
      %610 = vmatpush1.bf16.msra.mxu0 %v588
      %611 = vmatprep.subr.bf16.mxu0 0
      %612 = vmatpush2.bf16.msra.mxu0 0
      %613 = vmatprep.subr.bf16.mxu0 0
      %614 = vmatpush2.bf16.msra.mxu0 0
      %615 = vmatprep.subr.bf16.mxu0 0
      %616 = vmatpush2.bf16.msra.mxu0 0
      %617 = vmatprep.subr.bf16.mxu0 0
      %618 = vmatpush2.bf16.msra.mxu0 0
      %619 = vmatprep.subr.bf16.mxu0 0
      %620 = vmatpush2.bf16.msra.mxu0 0
      %621 = vmatprep.subr.bf16.mxu0 0
      %622 = vmatpush2.bf16.msra.mxu0 0
      %623 = vmatprep.subr.bf16.mxu0 0
      %624 = vmatpush2.bf16.msra.mxu0 0
      %625 = vmatprep.subr.bf16.mxu0 0
      %626 = vmatpush2.bf16.msra.mxu0 0
      %627 = vmatprep.mubr.bf16.mxu0 0
      %628 = vmatmul.mubr.bf16.gmra.mxu0 %v593
      %v629 = vpop.f32.mrf.mxu0
      %v630 = vadd.f32 0.0, %v629
      %v631 = vpop.f32.mrf.mxu0
      %v632 = vpop.f32.mrf.mxu0
      %v633 = vpop.f32.mrf.mxu0
      %634 = vdwg.mxu0
      %v635 = vld [vmem:[%s8] sm:$0xf]
      %v636 = vld [vmem:[%s8 + $0x4] sm:$0xf]
      %v637 = vld [vmem:[%s8 + $0x8] sm:$0xf]
      %v638 = vld [vmem:[%s8 + $0xc] sm:$0xf]
      %v643 = vunpack.c.l.b16 %v635
      %v644 = vunpack.c.l.b16 %v636
      %v645 = vunpack.c.l.b16 %v637
      %v646 = vunpack.c.l.b16 %v638
      %v647 = vpack.c.b16 %v644, %v643
      %v648 = vpack.c.b16 %v646, %v645
      %651 = vmatprep.subr.bf16.mxu0 0
      %652 = vmatpush1.bf16.msra.mxu0 0
      %653 = vmatprep.subr.bf16.mxu0 0
      %654 = vmatpush1.bf16.msra.mxu0 0
      %655 = vmatprep.subr.bf16.mxu0 0
      %656 = vmatpush1.bf16.msra.mxu0 0
      %657 = vmatprep.subr.bf16.mxu0 0
      %658 = vmatpush1.bf16.msra.mxu0 0
      %659 = vmatprep.subr.bf16.mxu0 0
      %660 = vmatpush1.bf16.msra.mxu0 0
      %661 = vmatprep.subr.bf16.mxu0 0
      %662 = vmatpush1.bf16.msra.mxu0 0
      %663 = vmatprep.subr.bf16.mxu0 0
      %664 = vmatpush1.bf16.msra.mxu0 %v648
      %665 = vmatprep.subr.bf16.mxu0 0
      %666 = vmatpush1.bf16.msra.mxu0 %v647
      %667 = vmatprep.subr.bf16.mxu0 0
      %668 = vmatpush2.bf16.msra.mxu0 0
      %669 = vmatprep.subr.bf16.mxu0 0
      %670 = vmatpush2.bf16.msra.mxu0 0
      %671 = vmatprep.subr.bf16.mxu0 0
      %672 = vmatpush2.bf16.msra.mxu0 0
      %673 = vmatprep.subr.bf16.mxu0 0
      %674 = vmatpush2.bf16.msra.mxu0 0
      %675 = vmatprep.subr.bf16.mxu0 0
      %676 = vmatpush2.bf16.msra.mxu0 0
      %677 = vmatprep.subr.bf16.mxu0 0
      %678 = vmatpush2.bf16.msra.mxu0 0
      %679 = vmatprep.subr.bf16.mxu0 0
      %680 = vmatpush2.bf16.msra.mxu0 0
      %681 = vmatprep.subr.bf16.mxu0 0
      %682 = vmatpush2.bf16.msra.mxu0 0
      %683 = vmatprep.mubr.bf16.mxu0 0
      %684 = vmatmul.mubr.bf16.gmra.mxu0 %v593
      %v685 = vpop.f32.mrf.mxu0
      %v686 = vadd.f32 0.0, %v685
      %v687 = vpop.f32.mrf.mxu0
      %v688 = vpop.f32.mrf.mxu0
      %v689 = vpop.f32.mrf.mxu0
      %690 = vdwg.mxu0
      %v691 = vpack.c.bf16 %v575, %v575
      %v692 = vpack.c.bf16 %v630, %v630
      %v693 = vpack.c.bf16 %v686, %v686
      %695 = vrot.lane.b32.xlu0 %v691, 112
      %v696 = vpop.permute.xlu0 %695
      %698 = vrot.lane.b32.xlu0 %v692, 112
      %v699 = vpop.permute.xlu0 %698
      %701 = vrot.lane.b32.xlu0 %v693, 112
      %v702 = vpop.permute.xlu0 %701
      %vm703 = vcmask 130048
      %v705 = vsel %vm703, %v691, 0
      %v708 = vsel %vm703, %v692, 0
      %710 = vmatprep.subr.bf16.mxu0 0
      %711 = vmatpush1.bf16.xpose.msra.mxu0 0
      %712 = vmatprep.subr.bf16.mxu0 0
      %713 = vmatpush1.bf16.xpose.msra.mxu0 0
      %714 = vmatprep.subr.bf16.mxu0 0
      %715 = vmatpush1.bf16.xpose.msra.mxu0 0
      %716 = vmatprep.subr.bf16.mxu0 0
      %717 = vmatpush1.bf16.xpose.msra.mxu0 0
      %718 = vmatprep.subr.bf16.mxu0 0
      %719 = vmatpush1.bf16.xpose.msra.mxu0 0
      %720 = vmatprep.subr.bf16.mxu0 0
      %721 = vmatpush1.bf16.xpose.msra.mxu0 0
      %722 = vmatprep.subr.bf16.mxu0 0
      %723 = vmatpush1.bf16.xpose.msra.mxu0 0
      %724 = vmatprep.subr.bf16.mxu0 0
      %725 = vmatpush1.bf16.xpose.msra.mxu0 %v708
      %726 = vmatprep.subr.bf16.mxu0 0
      %727 = vmatpush2.bf16.xpose.msra.mxu0 0
      %728 = vmatprep.subr.bf16.mxu0 0
      %729 = vmatpush2.bf16.xpose.msra.mxu0 0
      %730 = vmatprep.subr.bf16.mxu0 0
      %731 = vmatpush2.bf16.xpose.msra.mxu0 0
      %732 = vmatprep.subr.bf16.mxu0 0
      %733 = vmatpush2.bf16.xpose.msra.mxu0 0
      %734 = vmatprep.subr.bf16.mxu0 0
      %735 = vmatpush2.bf16.xpose.msra.mxu0 0
      %736 = vmatprep.subr.bf16.mxu0 0
      %737 = vmatpush2.bf16.xpose.msra.mxu0 0
      %738 = vmatprep.subr.bf16.mxu0 0
      %739 = vmatpush2.bf16.xpose.msra.mxu0 0
      %740 = vmatprep.subr.bf16.mxu0 0
      %741 = vmatpush2.bf16.xpose.msra.mxu0 0
      %742 = vmatprep.mubr.bf16.mxu0 0
      %743 = vmatmul.mubr.bf16.gmra.mxu0 %v705
      %v744 = vpop.f32.mrf.mxu0
      %v745 = vadd.f32 0.0, %v744
      %v746 = vpop.f32.mrf.mxu0
      %v747 = vpop.f32.mrf.mxu0
      %v748 = vpop.f32.mrf.mxu0
      %749 = vdwg.mxu0
      %v751 = vsel %vm703, %v696, 0
      %v754 = vsel %vm703, %v699, 0
      %756 = vmatprep.subr.bf16.mxu0 0
      %757 = vmatpush1.bf16.xpose.msra.mxu0 0
      %758 = vmatprep.subr.bf16.mxu0 0
      %759 = vmatpush1.bf16.xpose.msra.mxu0 0
      %760 = vmatprep.subr.bf16.mxu0 0
      %761 = vmatpush1.bf16.xpose.msra.mxu0 0
      %762 = vmatprep.subr.bf16.mxu0 0
      %763 = vmatpush1.bf16.xpose.msra.mxu0 0
      %764 = vmatprep.subr.bf16.mxu0 0
      %765 = vmatpush1.bf16.xpose.msra.mxu0 0
      %766 = vmatprep.subr.bf16.mxu0 0
      %767 = vmatpush1.bf16.xpose.msra.mxu0 0
      %768 = vmatprep.subr.bf16.mxu0 0
      %769 = vmatpush1.bf16.xpose.msra.mxu0 0
      %770 = vmatprep.subr.bf16.mxu0 0
      %771 = vmatpush1.bf16.xpose.msra.mxu0 %v754
      %772 = vmatprep.subr.bf16.mxu0 0
      %773 = vmatpush2.bf16.xpose.msra.mxu0 0
      %774 = vmatprep.subr.bf16.mxu0 0
      %775 = vmatpush2.bf16.xpose.msra.mxu0 0
      %776 = vmatprep.subr.bf16.mxu0 0
      %777 = vmatpush2.bf16.xpose.msra.mxu0 0
      %778 = vmatprep.subr.bf16.mxu0 0
      %779 = vmatpush2.bf16.xpose.msra.mxu0 0
      %780 = vmatprep.subr.bf16.mxu0 0
      %781 = vmatpush2.bf16.xpose.msra.mxu0 0
      %782 = vmatprep.subr.bf16.mxu0 0
      %783 = vmatpush2.bf16.xpose.msra.mxu0 0
      %784 = vmatprep.subr.bf16.mxu0 0
      %785 = vmatpush2.bf16.xpose.msra.mxu0 0
      %786 = vmatprep.subr.bf16.mxu0 0
      %787 = vmatpush2.bf16.xpose.msra.mxu0 0
      %788 = vmatprep.mubr.bf16.mxu0 0
      %789 = vmatmul.mubr.bf16.gmra.mxu0 %v751
      %v790 = vpop.f32.mrf.mxu0
      %v791 = vadd.f32 0.0, %v790
      %v792 = vpop.f32.mrf.mxu0
      %v793 = vpop.f32.mrf.mxu0
      %v794 = vpop.f32.mrf.mxu0
      %795 = vdwg.mxu0
      %v796 = vlaneseq
      %v797 = vshrl.u32 %v796, 7
      %v798 = vlaneseq
      %v799 = vand.u32 %v798, 127
      %vm800 = vcmp.le.s32.totalorder %v799, %v797
      %v801 = vsel %vm800, 1, 0
      %vm802 = vcmp.eq.s32.totalorder %v801, 1
      %v803 = vsel %vm802, %v745, -3.4028235e+38
      %v804 = vsel %vm802, %v791, -3.4028235e+38
      %vm805 = vcmask 64512
      %v806 = vsel %vm805, %v803, -inf
      %807 = vmax.xlane.f32.xlu0 %v806
      %v808 = vpop.xlane.xlu0 %807
      %v809 = vsel %vm805, %v804, -inf
      %810 = vmax.xlane.f32.xlu0 %v809
      %v811 = vpop.xlane.xlu0 %810
      %v812 = vsub.f32 %v803, %v808
      %v813 = vsub.f32 %v804, %v811
      %v814 = vmul.f32 %v812, 1.442695
      %v815 = vpow.pop %v814
      %v816 = vmul.f32 %v813, 1.442695
      %v817 = vpow.pop %v816
      %v818 = vsel %vm805, %v815, 0.0
      %819 = vadd.xlane.f32.xlu0 %v818
      %v820 = vpop.xlane.xlu0 %819
      %v821 = vsel %vm805, %v817, 0.0
      %822 = vadd.xlane.f32.xlu0 %v821
      %v823 = vpop.xlane.xlu0 %822
      %v824 = vrcp.pop %v820
      %v825 = vrcp.pop %v823
      %v826 = vmul.f32 %v815, %v824
      %v827 = vmul.f32 %v817, %v825
      %v828 = vpack.c.bf16 %v826, %v826
      %v829 = vpack.c.bf16 %v827, %v827
      %v831 = vsel %vm805, %v828, 0
      %vm833 = vcmask 1043456
      %v835 = vsel %vm833, %v693, 0
      %837 = vmatprep.subr.bf16.mxu0 0
      %838 = vmatpush1.bf16.msra.mxu0 0
      %839 = vmatprep.subr.bf16.mxu0 0
      %840 = vmatpush1.bf16.msra.mxu0 0
      %841 = vmatprep.subr.bf16.mxu0 0
      %842 = vmatpush1.bf16.msra.mxu0 0
      %843 = vmatprep.subr.bf16.mxu0 0
      %844 = vmatpush1.bf16.msra.mxu0 0
      %845 = vmatprep.subr.bf16.mxu0 0
      %846 = vmatpush1.bf16.msra.mxu0 0
      %847 = vmatprep.subr.bf16.mxu0 0
      %848 = vmatpush1.bf16.msra.mxu0 0
      %849 = vmatprep.subr.bf16.mxu0 0
      %850 = vmatpush1.bf16.msra.mxu0 0
      %851 = vmatprep.subr.bf16.mxu0 0
      %852 = vmatpush1.bf16.msra.mxu0 %v835
      %853 = vmatprep.subr.bf16.mxu0 0
      %854 = vmatpush2.bf16.msra.mxu0 0
      %855 = vmatprep.subr.bf16.mxu0 0
      %856 = vmatpush2.bf16.msra.mxu0 0
      %857 = vmatprep.subr.bf16.mxu0 0
      %858 = vmatpush2.bf16.msra.mxu0 0
      %859 = vmatprep.subr.bf16.mxu0 0
      %860 = vmatpush2.bf16.msra.mxu0 0
      %861 = vmatprep.subr.bf16.mxu0 0
      %862 = vmatpush2.bf16.msra.mxu0 0
      %863 = vmatprep.subr.bf16.mxu0 0
      %864 = vmatpush2.bf16.msra.mxu0 0
      %865 = vmatprep.subr.bf16.mxu0 0
      %866 = vmatpush2.bf16.msra.mxu0 0
      %867 = vmatprep.subr.bf16.mxu0 0
      %868 = vmatpush2.bf16.msra.mxu0 0
      %869 = vmatprep.mubr.bf16.mxu0 0
      %870 = vmatmul.mubr.bf16.gmra.mxu0 %v831
      %v871 = vpop.f32.mrf.mxu0
      %v872 = vadd.f32 0.0, %v871
      %v873 = vpop.f32.mrf.mxu0
      %v874 = vpop.f32.mrf.mxu0
      %v875 = vpop.f32.mrf.mxu0
      %876 = vdwg.mxu0
      %v878 = vsel %vm805, %v829, 0
      %v881 = vsel %vm833, %v702, 0
      %883 = vmatprep.subr.bf16.mxu0 0
      %884 = vmatpush1.bf16.msra.mxu0 0
      %885 = vmatprep.subr.bf16.mxu0 0
      %886 = vmatpush1.bf16.msra.mxu0 0
      %887 = vmatprep.subr.bf16.mxu0 0
      %888 = vmatpush1.bf16.msra.mxu0 0
      %889 = vmatprep.subr.bf16.mxu0 0
      %890 = vmatpush1.bf16.msra.mxu0 0
      %891 = vmatprep.subr.bf16.mxu0 0
      %892 = vmatpush1.bf16.msra.mxu0 0
      %893 = vmatprep.subr.bf16.mxu0 0
      %894 = vmatpush1.bf16.msra.mxu0 0
      %895 = vmatprep.subr.bf16.mxu0 0
      %896 = vmatpush1.bf16.msra.mxu0 0
      %897 = vmatprep.subr.bf16.mxu0 0
      %898 = vmatpush1.bf16.msra.mxu0 %v881
      %899 = vmatprep.subr.bf16.mxu0 0
      %900 = vmatpush2.bf16.msra.mxu0 0
      %901 = vmatprep.subr.bf16.mxu0 0
      %902 = vmatpush2.bf16.msra.mxu0 0
      %903 = vmatprep.subr.bf16.mxu0 0
      %904 = vmatpush2.bf16.msra.mxu0 0
      %905 = vmatprep.subr.bf16.mxu0 0
      %906 = vmatpush2.bf16.msra.mxu0 0
      %907 = vmatprep.subr.bf16.mxu0 0
      %908 = vmatpush2.bf16.msra.mxu0 0
      %909 = vmatprep.subr.bf16.mxu0 0
      %910 = vmatpush2.bf16.msra.mxu0 0
      %911 = vmatprep.subr.bf16.mxu0 0
      %912 = vmatpush2.bf16.msra.mxu0 0
      %913 = vmatprep.subr.bf16.mxu0 0
      %914 = vmatpush2.bf16.msra.mxu0 0
      %915 = vmatprep.mubr.bf16.mxu0 0
      %916 = vmatmul.mubr.bf16.gmra.mxu0 %v878
      %v917 = vpop.f32.mrf.mxu0
      %v918 = vadd.f32 0.0, %v917
      %v919 = vpop.f32.mrf.mxu0
      %v920 = vpop.f32.mrf.mxu0
      %v921 = vpop.f32.mrf.mxu0
      %922 = vdwg.mxu0
      %924 = vrot.lane.b32.xlu0 %v918, 16
      %v925 = vpop.permute.xlu0 %924
      %v927 = vsel %vm703, %v872, %v925
      %v928 = vpack.c.bf16 %v927, %v927
      %v929 = vld [vmem:[%s9] sm:$0xf]
      %v930 = vld [vmem:[%s9 + $0x4] sm:$0xf]
      %v931 = vld [vmem:[%s9 + $0x8] sm:$0xf]
      %v932 = vld [vmem:[%s9 + $0xc] sm:$0xf]
      %v937 = vunpack.c.l.b16 %v929
      %v938 = vunpack.c.l.b16 %v930
      %v939 = vunpack.c.l.b16 %v931
      %v940 = vunpack.c.l.b16 %v932
      %v941 = vpack.c.b16 %v938, %v937
      %v942 = vpack.c.b16 %v940, %v939
      %v946 = vsel %vm469, %v928, 0
      %948 = vmatprep.subr.bf16.mxu0 0
      %949 = vmatpush1.bf16.msra.mxu0 0
      %950 = vmatprep.subr.bf16.mxu0 0
      %951 = vmatpush1.bf16.msra.mxu0 0
      %952 = vmatprep.subr.bf16.mxu0 0
      %953 = vmatpush1.bf16.msra.mxu0 0
      %954 = vmatprep.subr.bf16.mxu0 0
      %955 = vmatpush1.bf16.msra.mxu0 0
      %956 = vmatprep.subr.bf16.mxu0 0
      %957 = vmatpush1.bf16.msra.mxu0 0
      %958 = vmatprep.subr.bf16.mxu0 0
      %959 = vmatpush1.bf16.msra.mxu0 0
      %960 = vmatprep.subr.bf16.mxu0 0
      %961 = vmatpush1.bf16.msra.mxu0 %v942
      %962 = vmatprep.subr.bf16.mxu0 0
      %963 = vmatpush1.bf16.msra.mxu0 %v941
      %964 = vmatprep.subr.bf16.mxu0 0
      %965 = vmatpush2.bf16.msra.mxu0 0
      %966 = vmatprep.subr.bf16.mxu0 0
      %967 = vmatpush2.bf16.msra.mxu0 0
      %968 = vmatprep.subr.bf16.mxu0 0
      %969 = vmatpush2.bf16.msra.mxu0 0
      %970 = vmatprep.subr.bf16.mxu0 0
      %971 = vmatpush2.bf16.msra.mxu0 0
      %972 = vmatprep.subr.bf16.mxu0 0
      %973 = vmatpush2.bf16.msra.mxu0 0
      %974 = vmatprep.subr.bf16.mxu0 0
      %975 = vmatpush2.bf16.msra.mxu0 0
      %976 = vmatprep.subr.bf16.mxu0 0
      %977 = vmatpush2.bf16.msra.mxu0 0
      %978 = vmatprep.subr.bf16.mxu0 0
      %979 = vmatpush2.bf16.msra.mxu0 0
      %980 = vmatprep.mubr.bf16.mxu0 0
      %981 = vmatmul.mubr.bf16.gmra.mxu0 %v946
      %v982 = vpop.f32.mrf.mxu0
      %v983 = vadd.f32 0.0, %v982
      %v984 = vpop.f32.mrf.mxu0
      %v985 = vpop.f32.mrf.mxu0
      %v986 = vpop.f32.mrf.mxu0
      %987 = vdwg.mxu0
      %v988 = vadd.f32 %v466, %v983
      %v989 = vpack.c.bf16 %v988, %v988
      %v990 = vld [vmem:[%s10] sm:$0xf]
      %v991 = vld [vmem:[%s10 + $0x4] sm:$0xf]
      %v992 = vld [vmem:[%s10 + $0x8] sm:$0xf]
      %v993 = vld [vmem:[%s10 + $0xc] sm:$0xf]
      %v994 = vld [vmem:[%s11] sm:$0x1]
      %v996 = vlaneseq
      %v997 = vshrl.u32 %v996, 7
      %v998 = vsub.s32 0, %v997
      %v999 = vrot.slane %v994, %v998
      %v1005 = vunpack.c.l.b16 %v990
      %v1006 = vunpack.c.l.b16 %v991
      %v1007 = vunpack.c.l.b16 %v992
      %v1008 = vunpack.c.l.b16 %v993
      %v1009 = vpack.c.b16 %v1006, %v1005
      %v1010 = vpack.c.b16 %v1008, %v1007
      %v1014 = vsel %vm469, %v989, 0
      %1016 = vmatprep.subr.bf16.mxu0 0
      %1017 = vmatpush1.bf16.msra.mxu0 0
      %1018 = vmatprep.subr.bf16.mxu0 0
      %1019 = vmatpush1.bf16.msra.mxu0 0
      %1020 = vmatprep.subr.bf16.mxu0 0
      %1021 = vmatpush1.bf16.msra.mxu0 0
      %1022 = vmatprep.subr.bf16.mxu0 0
      %1023 = vmatpush1.bf16.msra.mxu0 0
      %1024 = vmatprep.subr.bf16.mxu0 0
      %1025 = vmatpush1.bf16.msra.mxu0 0
      %1026 = vmatprep.subr.bf16.mxu0 0
      %1027 = vmatpush1.bf16.msra.mxu0 0
      %1028 = vmatprep.subr.bf16.mxu0 0
      %1029 = vmatpush1.bf16.msra.mxu0 %v1010
      %1030 = vmatprep.subr.bf16.mxu0 0
      %1031 = vmatpush1.bf16.msra.mxu0 %v1009
      %1032 = vmatprep.subr.bf16.mxu0 0
      %1033 = vmatpush2.bf16.msra.mxu0 0
      %1034 = vmatprep.subr.bf16.mxu0 0
      %1035 = vmatpush2.bf16.msra.mxu0 0
      %1036 = vmatprep.subr.bf16.mxu0 0
      %1037 = vmatpush2.bf16.msra.mxu0 0
      %1038 = vmatprep.subr.bf16.mxu0 0
      %1039 = vmatpush2.bf16.msra.mxu0 0
      %1040 = vmatprep.subr.bf16.mxu0 0
      %1041 = vmatpush2.bf16.msra.mxu0 0
      %1042 = vmatprep.subr.bf16.mxu0 0
      %1043 = vmatpush2.bf16.msra.mxu0 0
      %1044 = vmatprep.subr.bf16.mxu0 0
      %1045 = vmatpush2.bf16.msra.mxu0 0
      %1046 = vmatprep.subr.bf16.mxu0 0
      %1047 = vmatpush2.bf16.msra.mxu0 0
      %1048 = vmatprep.mubr.bf16.mxu0 0
      %1049 = vmatmul.mubr.bf16.gmra.mxu0 %v1014
      %v1050 = vpop.f32.mrf.mxu0
      %v1051 = vadd.f32 %v999, %v1050
      %v1052 = vpop.f32.mrf.mxu0
      %v1053 = vpop.f32.mrf.mxu0
      %v1054 = vpop.f32.mrf.mxu0
      %1055 = vdwg.mxu0
      %v1056 = vmul.f32 %v1051, 0.5
      %v1057 = vmul.f32 %v1051, 0.70710677
      %v1058 = verf.f32.pop %v1057
      %v1059 = vadd.f32 %v1058, 1.0
      %v1060 = vmul.f32 %v1056, %v1059
      %v1061 = vpack.c.bf16 %v1060, %v1060
      %v1062 = vld [vmem:[%s12] sm:$0xf]
      %v1063 = vld [vmem:[%s12 + $0x4] sm:$0xf]
      %v1064 = vld [vmem:[%s12 + $0x8] sm:$0xf]
      %v1065 = vld [vmem:[%s12 + $0xc] sm:$0xf]
      %v1066 = vld [vmem:[%s12 + $0x10] sm:$0xf]
      %v1067 = vld [vmem:[%s12 + $0x14] sm:$0xf]
      %v1068 = vld [vmem:[%s12 + $0x18] sm:$0xf]
      %v1069 = vld [vmem:[%s12 + $0x1c] sm:$0xf]
      %v1078 = vunpack.c.l.b16 %v1062
      %v1079 = vunpack.c.l.b16 %v1063
      %v1080 = vunpack.c.l.b16 %v1064
      %v1081 = vunpack.c.l.b16 %v1065
      %v1082 = vunpack.c.l.b16 %v1066
      %v1083 = vunpack.c.l.b16 %v1067
      %v1084 = vunpack.c.l.b16 %v1068
      %v1085 = vunpack.c.l.b16 %v1069
      %v1086 = vpack.c.b16 %v1079, %v1078
      %v1087 = vpack.c.b16 %v1081, %v1080
      %v1088 = vpack.c.b16 %v1083, %v1082
      %v1089 = vpack.c.b16 %v1085, %v1084
      %vm1094 = vcmask 523264
      %v1096 = vsel %vm1094, %v1061, 0
      %1098 = vmatprep.subr.bf16.mxu0 0
      %1099 = vmatpush1.bf16.msra.mxu0 0
      %1100 = vmatprep.subr.bf16.mxu0 0
      %1101 = vmatpush1.bf16.msra.mxu0 0
      %1102 = vmatprep.subr.bf16.mxu0 0
      %1103 = vmatpush1.bf16.msra.mxu0 0
      %1104 = vmatprep.subr.bf16.mxu0 0
      %1105 = vmatpush1.bf16.msra.mxu0 0
      %1106 = vmatprep.subr.bf16.mxu0 0
      %1107 = vmatpush1.bf16.msra.mxu0 %v1089
      %1108 = vmatprep.subr.bf16.mxu0 0
      %1109 = vmatpush1.bf16.msra.mxu0 %v1088
      %1110 = vmatprep.subr.bf16.mxu0 0
      %1111 = vmatpush1.bf16.msra.mxu0 %v1087
      %1112 = vmatprep.subr.bf16.mxu0 0
      %1113 = vmatpush1.bf16.msra.mxu0 %v1086
      %1114 = vmatprep.subr.bf16.mxu0 0
      %1115 = vmatpush2.bf16.msra.mxu0 0
      %1116 = vmatprep.subr.bf16.mxu0 0
      %1117 = vmatpush2.bf16.msra.mxu0 0
      %1118 = vmatprep.subr.bf16.mxu0 0
      %1119 = vmatpush2.bf16.msra.mxu0 0
      %1120 = vmatprep.subr.bf16.mxu0 0
      %1121 = vmatpush2.bf16.msra.mxu0 0
      %1122 = vmatprep.subr.bf16.mxu0 0
      %1123 = vmatpush2.bf16.msra.mxu0 0
      %1124 = vmatprep.subr.bf16.mxu0 0
      %1125 = vmatpush2.bf16.msra.mxu0 0
      %1126 = vmatprep.subr.bf16.mxu0 0
      %1127 = vmatpush2.bf16.msra.mxu0 0
      %1128 = vmatprep.subr.bf16.mxu0 0
      %1129 = vmatpush2.bf16.msra.mxu0 0
      %1130 = vmatprep.mubr.bf16.mxu0 0
      %1131 = vmatmul.mubr.bf16.gmra.mxu0 %v1096
      %v1132 = vpop.f32.mrf.mxu0
      %v1133 = vadd.f32 0.0, %v1132
      %v1134 = vpop.f32.mrf.mxu0
      %v1135 = vpop.f32.mrf.mxu0
      %v1136 = vpop.f32.mrf.mxu0
      %1137 = vdwg.mxu0
      %v1138 = vadd.f32 %v988, %v1133
      %v1139 = vld [vmem:[%s13] sm:$0x1]
      %v1141 = vlaneseq
      %v1142 = vshrl.u32 %v1141, 7
      %v1143 = vsub.s32 0, %v1142
      %v1144 = vrot.slane %v1139, %v1143
      %v1146 = vadd.f32 %v1138, %v1144
      %1147 = vst.msk [vmem:[%s462] sm:$0xff] %vm469, %v1146
      %p1148 = scmp.lt.s32.totalorder %s25, 1
      %s1149 = scalar_select %p1148, %s25, 1
      %s1150 = smul.addr %s1149, 8
      %s1151 = scalar_lea.vmem %s14, %s1150
      // Predicated region
      $region77: #{autoregressive_loss.3} parent=75 // pred_check
        %p1152 = pneg %p342
      $region78: #{autoregressive_loss.3} parent=75 // pred_check_branch
        %1154 = sbr.rel (%p1152) target = $region80
      $region79: #{autoregressive_loss.3} parent=75 // pred_region
        _
      $region80: #{autoregressive_loss.3} parent=75 // pred_fallthru
        _
    $region76: #{autoregressive_loss.3} parent=5 // pred_fallthru
      _
    %p1155 = scmp.le.s32.totalorder 2, %s20
    // Predicated region
    $region81: #{autoregressive_loss.3} parent=5 // pred_check
      %p1156 = pneg %p1155
    $region82: #{autoregressive_loss.3} parent=5 // pred_check_branch
      %1158 = sbr.rel (%p1156) target = $region84
    $region83: #{autoregressive_loss.3} parent=5 // pred_region
      %s1159 = ssub.s32 %s20, 2
      // Predicated region
      $region85: #{autoregressive_loss.3} parent=83 // pred_check
        %p1160 = pneg %p348
      $region86: #{autoregressive_loss.3} parent=83 // pred_check_branch
        %1162 = sbr.rel (%p1160) target = $region88
      $region87: #{autoregressive_loss.3} parent=83 // pred_region
        %p1163 = scmp.lt.s32.totalorder %s26, 1
        %s1164 = scalar_select %p1163, %s26, 1
        %s1165 = smul.addr %s1164, 8
        %s1166 = scalar_lea.vmem %s14, %s1165
      $region88: #{autoregressive_loss.3} parent=83 // pred_fallthru
        _
    $region84: #{autoregressive_loss.3} parent=5 // pred_fallthru
      _
  $region6: #{autoregressive_loss.3} parent=0 // loop_footer
    %s24 = sadd.s32 1, %s20
  $region7: #{autoregressive_loss.3} parent=0 // loop_footer_branch
    %19 = sbr.rel target = $region3
  $region8: #{autoregressive_loss.3} parent=0 // loop_exit
    _

</llo_original>
